<compile_context>
chip_gen: v5e
topology: v5e:2x2
jax: 0.10.0
libtpu: 0.0.40
codegen_flags: <defaults>
</compile_context>

<pallas_src>
import functools
import math

import jax
import jax.numpy as jnp
from jax.experimental import pallas as pl
from jax.experimental.pallas import tpu as pltpu


# Rows of the f32 bias / LayerNorm vector slab (per layer).
ROW_BQKV1, ROW_BO1 = 0, 1
ROW_BQKV2, ROW_BO2 = 2, 3
ROW_B1, ROW_B2 = 4, 5
ROW_LN1G, ROW_LN1B = 6, 7
ROW_LN2G, ROW_LN2B = 8, 9
ROW_LN3G, ROW_LN3B = 10, 11
N_VEC_ROWS = 12


def _round_up(a, m):
    return (a + m - 1) // m * m


# ------------------------------ fused stack kernel ---------------------------

def decoder_stack_kernel(TB, Lq, Le, Dp, Fp, H, inv_d,
                         x_ref, enc_ref, sbias_ref, ebias_ref,
                         wqkv_ref, womisc_ref, w1_ref, vec_ref,
                         out_ref, carry):
    """One grid step = one (batch tile, layer).

    x_ref:    [TB*Lq, Dp] f32   embedded+positional tokens (padded, zero pad cols)
    enc_ref:  [TB*Le, Dp] bf16  encoder output (padded, pre-cast)
    sbias/ebias: [TB, Lq, Lq] / [TB, Lq, Le] f32 additive mask bias (0 / -1e9)
    wqkv_ref:   [1, 2*Dp, 3*Dp] bf16  rows [0:Dp]=self QKV, [Dp:2Dp]=cross QKV
    womisc_ref: [1, 2*Dp+Fp, Dp] bf16 rows [0:Dp]=Wo1, [Dp:2Dp]=Wo2, [2Dp:]=W2
    w1_ref:     [1, Dp, Fp] bf16
    vec_ref:    [1, 12, WV] f32   biases + LayerNorm gamma/beta (zero padded)
    carry:      VMEM scratch [TB*Lq, Dp] f32, resident across the layer loop.
    """
    dkp = Dp // H
    bf16 = jnp.bfloat16
    layer = pl.program_id(1)

    @pl.when(layer == 0)
    def _():
        carry[...] = x_ref[...]

    x = carry[...]                                   # [M, Dp] f32, M = TB*Lq
    vec = vec_ref[0]                                 # [12, WV] f32
    enc16 = enc_ref[...]                             # [TB*Le, Dp] bf16
    sbias = sbias_ref[...]                           # [TB, Lq, Lq]
    ebias = ebias_ref[...]                           # [TB, Lq, Le]

    def layernorm(v, g_row, b_row):
        # Mean/var over the REAL d_model features only; padding columns of v are
        # zero, so sums over Dp equal sums over d_model (inv_d = 1/d_model).
        g = vec[g_row:g_row + 1, :Dp]                # padded gamma/beta are zero
        b = vec[b_row:b_row + 1, :Dp]                # -> padded output cols stay 0
        mu = jnp.sum(v, axis=-1, keepdims=True) * inv_d
        ex2 = jnp.sum(v * v, axis=-1, keepdims=True) * inv_d
        var = jnp.maximum(ex2 - mu * mu, 0.0)
        return (v - mu) * jax.lax.rsqrt(var + 1e-5) * g + b

    def attend(q, kv, bias, lq, lk):
        # q: [TB*lq, Dp] f32 (scale pre-folded into Wq/bq), kv: [TB*lk, 2*Dp] f32.
        # Short static head loop; scores/contexts are leading-batch einsums over
        # the batch tile.  For very large H*L switch to a flash-style fori_loop.
        ctx_heads = []
        for h in range(H):
            qh = q[:, h * dkp:(h + 1) * dkp].reshape(TB, lq, dkp).astype(bf16)
            kh = kv[:, h * dkp:(h + 1) * dkp].reshape(TB, lk, dkp).astype(bf16)
            vh = kv[:, Dp + h * dkp:Dp + (h + 1) * dkp].reshape(TB, lk, dkp).astype(bf16)
            s = jnp.einsum('bqd,bkd->bqk', qh, kh,
                           preferred_element_type=jnp.float32) + bias
            s = s - jnp.max(s, axis=-1, keepdims=True)
            p = jnp.exp(s)
            inv = pl.reciprocal(jnp.sum(p, axis=-1, keepdims=True), approx=True)
            c = jnp.einsum('bqk,bkd->bqd', (p * inv).astype(bf16), vh,
                           preferred_element_type=jnp.float32)
            ctx_heads.append(c.reshape(TB * lq, dkp))
        return jnp.concatenate(ctx_heads, axis=-1).astype(bf16)   # [TB*lq, Dp]

    # --- sublayer 1: pre-norm self-attention + residual ---
    xn = layernorm(x, ROW_LN1G, ROW_LN1B).astype(bf16)
    qkv = jnp.dot(xn, wqkv_ref[0, 0:Dp, :],
                  preferred_element_type=jnp.float32) \
        + vec[ROW_BQKV1:ROW_BQKV1 + 1, :3 * Dp]                    # [M, 3Dp]
    ctx = attend(qkv[:, :Dp], qkv[:, Dp:], sbias, Lq, Lq)
    attn = jnp.dot(ctx, womisc_ref[0, 0:Dp, :],
                   preferred_element_type=jnp.float32) \
        + vec[ROW_BO1:ROW_BO1 + 1, :Dp]
    x = x + attn

    # --- sublayer 2: pre-norm encoder-decoder attention + residual ---
    xn = layernorm(x, ROW_LN2G, ROW_LN2B).astype(bf16)
    q2 = jnp.dot(xn, wqkv_ref[0, Dp:2 * Dp, 0:Dp],
                 preferred_element_type=jnp.float32) \
        + vec[ROW_BQKV2:ROW_BQKV2 + 1, :Dp]
    kv2 = jnp.dot(enc16, wqkv_ref[0, Dp:2 * Dp, Dp:],
                  preferred_element_type=jnp.float32) \
        + vec[ROW_BQKV2:ROW_BQKV2 + 1, Dp:3 * Dp]
    ctx2 = attend(q2, kv2, ebias, Lq, Le)
    ede = jnp.dot(ctx2, womisc_ref[0, Dp:2 * Dp, :],
                  preferred_element_type=jnp.float32) \
        + vec[ROW_BO2:ROW_BO2 + 1, :Dp]
    x = x + ede

    # --- sublayer 3: FFN.  NOTE: the reference uses the en-de attention output
    # (not x) as the residual here -- reproduced exactly. ---
    out2 = layernorm(x, ROW_LN3G, ROW_LN3B).astype(bf16)
    hid = jnp.dot(out2, w1_ref[0],
                  preferred_element_type=jnp.float32) \
        + vec[ROW_B1:ROW_B1 + 1, :Fp]
    hid = jnp.maximum(hid, 0.0).astype(bf16)                       # ReLU, bf16 feed
    ffn = jnp.dot(hid, womisc_ref[0, 2 * Dp:, :],
                  preferred_element_type=jnp.float32) \
        + vec[ROW_B2:ROW_B2 + 1, :Dp]
    new_x = ede + ffn

    carry[...] = new_x                               # stays resident in VMEM

    @pl.when(layer == pl.num_programs(1) - 1)
    def _():
        out_ref[...] = new_x                         # one lane-dense HBM writeback


# ------------------------------- host wrapper ---------------------------------

def _choose_tile_b(B, max_tile=8):
    divs = [d for d in range(1, min(B, max_tile) + 1) if B % d == 0]
    two_step = [d for d in divs if B // d >= 2]      # keep >=2 parallel steps (v7x)
    return max(two_step) if two_step else max(divs)


def _pick_vmem_limit(needed_bytes):
    phys = 128 * 1024 * 1024
    try:
        phys = int(pltpu.get_tpu_info().vmem_capacity_bytes)
    except Exception:
        pass
    cap = max(32 << 20, phys - (16 << 20))           # v7x: 64 MiB/TC -> 48 MiB cap
    want = max(32 << 20, 2 * int(needed_bytes) + (8 << 20))
    return int(min(want, cap))


def decoder_stack(x2d, enc2d, sbias, ebias, packed, *, num_heads, d_model, B, L, Le):
    Dp, Fp = packed['Dp'], packed['Fp']
    num_layers = packed['wqkv'].shape[0]
    WV = packed['vec'].shape[-1]
    TB = _choose_tile_b(B)

    # rough VMEM footprint: double-buffered slabs + activation blocks + carry
    slab_bytes = 2 * ((2 * Dp * 3 * Dp + (2 * Dp + Fp) * Dp + Dp * Fp) * 2
                      + N_VEC_ROWS * WV * 4)
    act_bytes = 2 * (TB * L * Dp * 4 + TB * Le * Dp * 2
                     + TB * L * L * 4 + TB * L * Le * 4 + TB * L * Dp * 4) \
        + TB * L * Dp * 4
    vmem_limit = _pick_vmem_limit(slab_bytes + act_bytes)

    x_spec = pl.BlockSpec((TB * L, Dp), lambda bt, l: (bt, 0))
    enc_spec = pl.BlockSpec((TB * Le, Dp), lambda bt, l: (bt, 0))
    sb_spec = pl.BlockSpec((TB, L, L), lambda bt, l: (bt, 0, 0))
    eb_spec = pl.BlockSpec((TB, L, Le), lambda bt, l: (bt, 0, 0))
    wqkv_spec = pl.BlockSpec((1, 2 * Dp, 3 * Dp), lambda bt, l: (l, 0, 0))
    womisc_spec = pl.BlockSpec((1, 2 * Dp + Fp, Dp), lambda bt, l: (l, 0, 0))
    w1_spec = pl.BlockSpec((1, Dp, Fp), lambda bt, l: (l, 0, 0))
    vec_spec = pl.BlockSpec((1, N_VEC_ROWS, WV), lambda bt, l: (l, 0, 0))
    out_spec = pl.BlockSpec((TB * L, Dp), lambda bt, l: (bt, 0))

    kernel = functools.partial(decoder_stack_kernel,
                               TB, L, Le, Dp, Fp, num_heads, 1.0 / d_model)

    return pl.pallas_call(
        kernel,
        out_shape=jax.ShapeDtypeStruct((B * L, Dp), jnp.float32),
        grid_spec=pltpu.PrefetchScalarGridSpec(
            num_scalar_prefetch=0,
            grid=(B // TB, num_layers),              # batch tiles outer, layers inner
            in_specs=[x_spec, enc_spec, sb_spec, eb_spec,
                      wqkv_spec, womisc_spec, w1_spec, vec_spec],
            out_specs=out_spec,
            scratch_shapes=[pltpu.VMEM((TB * L, Dp), jnp.float32)]),
        compiler_params=pltpu.CompilerParams(
            dimension_semantics=("parallel", "arbitrary"),
            vmem_limit_bytes=vmem_limit),
    )(x2d, enc2d, sbias, ebias,
      packed['wqkv'], packed['womisc'], packed['w1'], packed['vec'])


# ------------------------- parameters & host-side repack ----------------------

def _init_linear(key, din, dout):
    kw, kb = jax.random.split(key)
    w = jax.random.normal(kw, (din, dout), jnp.float32) * (1.0 / math.sqrt(din))
    b = jax.random.normal(kb, (dout,), jnp.float32) * 0.02
    return w, b


def _init_layer(key, d_model, d_ff):
    ks = jax.random.split(key, 10)
    p = {'n1g': jnp.ones((d_model,), jnp.float32),
         'n1b': jnp.zeros((d_model,), jnp.float32),
         'n2g': jnp.ones((d_model,), jnp.float32),
         'n2b': jnp.zeros((d_model,), jnp.float32),
         'n3g': jnp.ones((d_model,), jnp.float32),
         'n3b': jnp.zeros((d_model,), jnp.float32)}
    for i, name in enumerate(('q1', 'k1', 'v1', 'o1', 'q2', 'k2', 'v2', 'o2')):
        w, b = _init_linear(ks[i], d_model, d_model)
        p['w' + name], p['b' + name] = w, b
    p['w1'], p['b1'] = _init_linear(ks[8], d_model, d_ff)
    p['w2'], p['b2'] = _init_linear(ks[9], d_ff, d_model)
    return p


def prepare_packed_params(layers, num_heads, d_model, d_ff):
    """Pack per-layer params into 4 stacked slabs, zero-pad feature dims to 128
    multiples, split attention heads in the weight layout, and fold 1/sqrt(dk)
    into the Q projection.  Matmul weights are stored bf16, vectors f32."""
    assert d_model % num_heads == 0
    Dp = _round_up(d_model, 128)
    while Dp % num_heads:
        Dp += 128
    Fp = _round_up(d_ff, 128)
    dk = d_model // num_heads
    dkp = Dp // num_heads
    scale = 1.0 / math.sqrt(dk)
    WV = max(3 * Dp, Fp)
    bf16 = jnp.bfloat16

    def pad_vec(v, width=WV):
        v = jnp.asarray(v, jnp.float32).reshape(-1)
        return jnp.pad(v, (0, width - v.shape[0]))

    def pad_head_cols(w, s=1.0):         # [d_model, d_model] -> [Dp, H*dkp]
        w3 = (w * s).reshape(d_model, num_heads, dk)
        w3 = jnp.pad(w3, ((0, Dp - d_model), (0, 0), (0, dkp - dk)))
        return w3.reshape(Dp, Dp)

    def pad_head_rows(w):                # [H*dk, d_model] -> [H*dkp, Dp]
        w3 = w.reshape(num_heads, dk, d_model)
        w3 = jnp.pad(w3, ((0, 0), (0, dkp - dk), (0, Dp - d_model)))
        return w3.reshape(Dp, Dp)

    def pad_head_bias(b, s=1.0):         # [d_model] -> [H*dkp]
        b2 = jnp.asarray(b, jnp.float32).reshape(num_heads, dk) * s
        return jnp.pad(b2, ((0, 0), (0, dkp - dk))).reshape(Dp)

    wqkv_l, womisc_l, w1_l, vec_l = [], [], [], []
    for p in layers:
        wqkv1 = jnp.concatenate([pad_head_cols(p['wq1'], scale),
                                 pad_head_cols(p['wk1']),
                                 pad_head_cols(p['wv1'])], axis=1)     # [Dp, 3Dp]
        wqkv2 = jnp.concatenate([pad_head_cols(p['wq2'], scale),
                                 pad_head_cols(p['wk2']),
                                 pad_head_cols(p['wv2'])], axis=1)
        wqkv_l.append(jnp.concatenate([wqkv1, wqkv2], axis=0))         # [2Dp, 3Dp]

        w2 = jnp.pad(p['w2'], ((0, Fp - d_ff), (0, Dp - d_model)))     # [Fp, Dp]
        womisc_l.append(jnp.concatenate([pad_head_rows(p['wo1']),
                                         pad_head_rows(p['wo2']),
                                         w2], axis=0))                 # [2Dp+Fp, Dp]

        w1_l.append(jnp.pad(p['w1'], ((0, Dp - d_model), (0, Fp - d_ff))))  # [Dp, Fp]

        bqkv1 = jnp.concatenate([pad_head_bias(p['bq1'], scale),
                                 pad_head_bias(p['bk1']),
                                 pad_head_bias(p['bv1'])])
        bqkv2 = jnp.concatenate([pad_head_bias(p['bq2'], scale),
                                 pad_head_bias(p['bk2']),
                                 pad_head_bias(p['bv2'])])
        vec_l.append(jnp.stack([
            pad_vec(bqkv1), pad_vec(p['bo1']),
            pad_vec(bqkv2), pad_vec(p['bo2']),
            pad_vec(p['b1']), pad_vec(p['b2']),
            pad_vec(p['n1g']), pad_vec(p['n1b']),
            pad_vec(p['n2g']), pad_vec(p['n2b']),
            pad_vec(p['n3g']), pad_vec(p['n3b'])]))                    # [12, WV]

    return {'wqkv': jnp.stack(wqkv_l).astype(bf16),
            'womisc': jnp.stack(womisc_l).astype(bf16),
            'w1': jnp.stack(w1_l).astype(bf16),
            'vec': jnp.stack(vec_l).astype(jnp.float32),
            'Dp': Dp, 'Fp': Fp}


def init_decoder_params(key, vocab_size, d_model, d_ff, num_layers, num_heads,
                        max_len=1000, dec_pdx=0):
    keys = jax.random.split(key, num_layers + 1)
    emb = jax.random.normal(keys[0], (vocab_size, d_model), jnp.float32)
    emb = emb.at[dec_pdx].set(0.0)                       # padding_idx row

    position = jnp.arange(max_len, dtype=jnp.float32)[:, None]
    div_term = jnp.exp(jnp.arange(0, d_model, 2, dtype=jnp.float32)
                       * (-math.log(10000.0) / d_model))
    pe = jnp.zeros((max_len, d_model), jnp.float32)
    pe = pe.at[:, 0::2].set(jnp.sin(position * div_term))
    pe = pe.at[:, 1::2].set(jnp.cos(position * div_term))

    layers = [_init_layer(keys[i + 1], d_model, d_ff) for i in range(num_layers)]
    packed = prepare_packed_params(layers, num_heads, d_model, d_ff)
    return {'emb': emb, 'pe': pe, 'packed': packed}


def decoder_forward(params, dec_inputs, self_mask, enc_output, encoder_mask,
                    d_model, num_heads):
    B, L = dec_inputs.shape
    Le = enc_output.shape[1]
    packed = params['packed']
    Dp = packed['Dp']

    src = params['emb'][dec_inputs] * math.sqrt(d_model)     # embedding gather (glue)
    src = src + params['pe'][:L, :]                          # positional encoding
    # dropout == identity (inference)

    pad = Dp - d_model
    x2d = jnp.pad(src, ((0, 0), (0, 0), (0, pad))).reshape(B * L, Dp)
    enc2d = jnp.pad(enc_output, ((0, 0), (0, 0), (0, pad))
                    ).astype(jnp.bfloat16).reshape(B * Le, Dp)
    # masked_fill(mask, -1e9) reproduced as an additive bias (precomputed once)
    sbias = jnp.where(self_mask > 0.5, -1e9, 0.0).astype(jnp.float32)
    ebias = jnp.where(encoder_mask > 0.5, -1e9, 0.0).astype(jnp.float32)

    out = decoder_stack(x2d, enc2d, sbias, ebias, packed,
                        num_heads=num_heads, d_model=d_model, B=B, L=L, Le=Le)
    return out.reshape(B, L, Dp)[:, :, :d_model]


# ----------------------------------- main -------------------------------------

if __name__ == "__main__":
    vocab_size = 50
    d_model = 32
    num_heads = 4
    d_ff = 64
    num_layers = 2
    B, L, L_enc = 2, 8, 8

    root = jax.random.PRNGKey(0)
    k_params, k_tok, k_enc = jax.random.split(root, 3)

    params = init_decoder_params(k_params, vocab_size, d_model, d_ff,
                                 num_layers, num_heads)

    dec_inputs = jax.random.randint(k_tok, (B, L), 0, vocab_size, dtype=jnp.int32)
    enc_output = jax.random.normal(k_enc, (B, L_enc, d_model), jnp.float32)

    # causal self-attention mask (1.0 = masked future position)
    causal = jnp.triu(jnp.ones((L, L), jnp.float32), k=1)
    self_mask = jnp.broadcast_to(causal, (B, L, L))
    # encoder pad mask: nothing masked in this synthetic example
    encoder_mask = jnp.zeros((B, L, L_enc), jnp.float32)

    out = decoder_forward(params, dec_inputs, self_mask, enc_output,
                          encoder_mask, d_model, num_heads)
    out = jax.block_until_ready(out)
    assert out.shape == (B, L, d_model)
    assert bool(jnp.all(jnp.isfinite(out)))
    print("KERNEL_OK")
</pallas_src>

<mosaic_0001>
module attributes {stable_mosaic.version = 11 : i64} {
  func.func @decoder_stack_kernel(%arg0: i32, %arg1: i32, %arg2: memref<8x128xf32, #tpu.memory_space<vmem>>, %arg3: memref<8x128xbf16, #tpu.memory_space<vmem>>, %arg4: memref<1x8x8xf32, #tpu.memory_space<vmem>>, %arg5: memref<1x8x8xf32, #tpu.memory_space<vmem>>, %arg6: memref<1x256x384xbf16, #tpu.memory_space<vmem>>, %arg7: memref<1x384x128xbf16, #tpu.memory_space<vmem>>, %arg8: memref<1x128x128xbf16, #tpu.memory_space<vmem>>, %arg9: memref<1x12x384xf32, #tpu.memory_space<vmem>>, %arg10: memref<8x128xf32, #tpu.memory_space<vmem>>, %arg11: memref<8x128xf32, #tpu.memory_space<vmem>>) attributes {dimension_semantics = [#tpu.dimension_semantics<parallel>, #tpu.dimension_semantics<arbitrary>], iteration_bounds = array<i64: 2, 2>, scalar_prefetch = 0 : i64, scratch_operands = 1 : i64, tpu.core_type = #tpu.core_type<tc>, window_params = [{transform_indices = @transform_0, window_bounds = array<i64: 8, 128>}, {transform_indices = @transform_1, window_bounds = array<i64: 8, 128>}, {transform_indices = @transform_2, window_bounds = array<i64: 1, 8, 8>}, {transform_indices = @transform_3, window_bounds = array<i64: 1, 8, 8>}, {transform_indices = @transform_4, window_bounds = array<i64: 1, 256, 384>}, {transform_indices = @transform_5, window_bounds = array<i64: 1, 384, 128>}, {transform_indices = @transform_6, window_bounds = array<i64: 1, 128, 128>}, {transform_indices = @transform_7, window_bounds = array<i64: 1, 12, 384>}, {transform_indices = @transform_8, window_bounds = array<i64: 8, 128>}]} {
    %c0_i32 = arith.constant 0 : i32
    %0 = arith.cmpi eq, %arg1, %c0_i32 : i32
    %1 = arith.extui %0 : i1 to i32
    %c0_i32_0 = arith.constant 0 : i32
    %2 = arith.cmpi ne, %1, %c0_i32_0 : i32
    scf.if %2 {
      %c0_92 = arith.constant 0 : index
      %c0_93 = arith.constant 0 : index
      %340 = vector.load %arg2[%c0_92, %c0_93] : memref<8x128xf32, #tpu.memory_space<vmem>>, vector<8x128xf32>
      %c0_94 = arith.constant 0 : index
      %c0_95 = arith.constant 0 : index
      %341 = vector.load %arg11[%c0_94, %c0_95] : memref<8x128xf32, #tpu.memory_space<vmem>>, vector<8x128xf32>
      tpu.vector_store %arg11[%c0_94, %c0_95], %340 {strides = array<i32>} : memref<8x128xf32, #tpu.memory_space<vmem>>, vector<8x128xf32>,
    } else {
    }
    %c0 = arith.constant 0 : index
    %c0_1 = arith.constant 0 : index
    %3 = vector.load %arg11[%c0, %c0_1] : memref<8x128xf32, #tpu.memory_space<vmem>>, vector<8x128xf32>
    %c0_2 = arith.constant 0 : index
    %c0_3 = arith.constant 0 : index
    %c0_4 = arith.constant 0 : index
    %4 = vector.load %arg9[%c0_2, %c0_3, %c0_4] : memref<1x12x384xf32, #tpu.memory_space<vmem>>, vector<1x12x384xf32>
    %5 = vector.shape_cast %4 : vector<1x12x384xf32> to vector<12x384xf32>
    %c0_5 = arith.constant 0 : index
    %c0_6 = arith.constant 0 : index
    %6 = vector.load %arg3[%c0_5, %c0_6] : memref<8x128xbf16, #tpu.memory_space<vmem>>, vector<8x128xbf16>
    %c0_7 = arith.constant 0 : index
    %c0_8 = arith.constant 0 : index
    %c0_9 = arith.constant 0 : index
    %7 = vector.load %arg4[%c0_7, %c0_8, %c0_9] : memref<1x8x8xf32, #tpu.memory_space<vmem>>, vector<1x8x8xf32>
    %c0_10 = arith.constant 0 : index
    %c0_11 = arith.constant 0 : index
    %c0_12 = arith.constant 0 : index
    %8 = vector.load %arg5[%c0_10, %c0_11, %c0_12] : memref<1x8x8xf32, #tpu.memory_space<vmem>>, vector<1x8x8xf32>
    %9 = vector.extract_strided_slice %5 {offsets = [6, 0], sizes = [1, 128], strides = [1, 1]} : vector<12x384xf32> to vector<1x128xf32>
    %10 = vector.extract_strided_slice %5 {offsets = [7, 0], sizes = [1, 128], strides = [1, 1]} : vector<12x384xf32> to vector<1x128xf32>
    %cst = arith.constant dense<0.000000e+00> : vector<8xf32>
    %11 = vector.multi_reduction <add>, %3, %cst [1] : vector<8x128xf32> to vector<8xf32>
    %12 = vector.shape_cast %11 : vector<8xf32> to vector<8x1xf32>
    %cst_13 = arith.constant 3.125000e-02 : f32
    %13 = vector.broadcast %cst_13 : f32 to vector<8x1xf32>
    %14 = arith.mulf %12, %13 : vector<8x1xf32>
    %15 = arith.mulf %3, %3 : vector<8x128xf32>
    %cst_14 = arith.constant dense<0.000000e+00> : vector<8xf32>
    %16 = vector.multi_reduction <add>, %15, %cst_14 [1] : vector<8x128xf32> to vector<8xf32>
    %17 = vector.shape_cast %16 : vector<8xf32> to vector<8x1xf32>
    %cst_15 = arith.constant 3.125000e-02 : f32
    %18 = vector.broadcast %cst_15 : f32 to vector<8x1xf32>
    %19 = arith.mulf %17, %18 : vector<8x1xf32>
    %20 = arith.mulf %14, %14 : vector<8x1xf32>
    %21 = arith.subf %19, %20 : vector<8x1xf32>
    %cst_16 = arith.constant 0.000000e+00 : f32
    %22 = vector.broadcast %cst_16 : f32 to vector<8x1xf32>
    %23 = arith.maximumf %21, %22 : vector<8x1xf32>
    %24 = vector.broadcast %14 : vector<8x1xf32> to vector<8x128xf32>
    %25 = arith.subf %3, %24 : vector<8x128xf32>
    %cst_17 = arith.constant 9.99999974E-6 : f32
    %26 = vector.broadcast %cst_17 : f32 to vector<8x1xf32>
    %27 = arith.addf %23, %26 : vector<8x1xf32>
    %28 = math.rsqrt %27 : vector<8x1xf32>
    %29 = vector.broadcast %28 : vector<8x1xf32> to vector<8x128xf32>
    %30 = arith.mulf %25, %29 : vector<8x128xf32>
    %31 = vector.broadcast %9 : vector<1x128xf32> to vector<8x128xf32>
    %32 = arith.mulf %30, %31 : vector<8x128xf32>
    %33 = vector.broadcast %10 : vector<1x128xf32> to vector<8x128xf32>
    %34 = arith.addf %32, %33 : vector<8x128xf32>
    %35 = arith.truncf %34 : vector<8x128xf32> to vector<8x128xbf16>
    %c0_18 = arith.constant 0 : index
    %c0_19 = arith.constant 0 : index
    %c0_20 = arith.constant 0 : index
    %36 = vector.load %arg6[%c0_18, %c0_19, %c0_20] : memref<1x256x384xbf16, #tpu.memory_space<vmem>>, vector<1x128x384xbf16>
    %37 = vector.shape_cast %36 : vector<1x128x384xbf16> to vector<128x384xbf16>
    %cst_21 = arith.constant dense<0.000000e+00> : vector<8x384xf32>
    %38 = tpu.matmul %35, %37, %cst_21 {dimension_numbers = #tpu.dot_dimension_numbers<[1], [0], [0], [1], [0, 0, 1, 1], [], []>} : vector<8x128xbf16>, vector<128x384xbf16>, vector<8x384xf32> -> vector<8x384xf32>
    %39 = vector.extract_strided_slice %5 {offsets = [0, 0], sizes = [1, 384], strides = [1, 1]} : vector<12x384xf32> to vector<1x384xf32>
    %40 = vector.broadcast %39 : vector<1x384xf32> to vector<8x384xf32>
    %41 = arith.addf %38, %40 : vector<8x384xf32>
    %42 = vector.extract_strided_slice %41 {offsets = [0, 0], sizes = [8, 128], strides = [1, 1]} : vector<8x384xf32> to vector<8x128xf32>
    %43 = vector.extract_strided_slice %41 {offsets = [0, 128], sizes = [8, 256], strides = [1, 1]} : vector<8x384xf32> to vector<8x256xf32>
    %44 = vector.extract_strided_slice %42 {offsets = [0, 0], sizes = [8, 32], strides = [1, 1]} : vector<8x128xf32> to vector<8x32xf32>
    %45 = vector.shape_cast %44 : vector<8x32xf32> to vector<1x8x32xf32>
    %46 = arith.truncf %45 : vector<1x8x32xf32> to vector<1x8x32xbf16>
    %47 = vector.extract_strided_slice %43 {offsets = [0, 0], sizes = [8, 32], strides = [1, 1]} : vector<8x256xf32> to vector<8x32xf32>
    %48 = vector.shape_cast %47 : vector<8x32xf32> to vector<1x8x32xf32>
    %49 = arith.truncf %48 : vector<1x8x32xf32> to vector<1x8x32xbf16>
    %50 = vector.extract_strided_slice %43 {offsets = [0, 128], sizes = [8, 32], strides = [1, 1]} : vector<8x256xf32> to vector<8x32xf32>
    %51 = vector.shape_cast %50 : vector<8x32xf32> to vector<1x8x32xf32>
    %52 = arith.truncf %51 : vector<1x8x32xf32> to vector<1x8x32xbf16>
    "tpu.trace_start"() <{level = 10 : i32, message = "bqd,bkd->bqk"}> : () -> ()
    %cst_22 = arith.constant dense<0.000000e+00> : vector<1x8x8xf32>
    %53 = tpu.matmul %46, %49, %cst_22 {dimension_numbers = #tpu.dot_dimension_numbers<[2], [2], [1], [1], [0, 0, 0, 1, 1, 1], [0], [0]>} : vector<1x8x32xbf16>, vector<1x8x32xbf16>, vector<1x8x8xf32> -> vector<1x8x8xf32>
    "tpu.trace_stop"() : () -> ()
    %54 = arith.addf %53, %7 : vector<1x8x8xf32>
    %cst_23 = arith.constant dense<0xFF800000> : vector<1x8xf32>
    %55 = vector.multi_reduction <maximumf>, %54, %cst_23 [2] : vector<1x8x8xf32> to vector<1x8xf32>
    %56 = vector.shape_cast %55 : vector<1x8xf32> to vector<1x8x1xf32>
    %57 = vector.broadcast %56 : vector<1x8x1xf32> to vector<1x8x8xf32>
    %58 = arith.subf %54, %57 : vector<1x8x8xf32>
    %59 = math.exp %58 : vector<1x8x8xf32>
    %cst_24 = arith.constant dense<0.000000e+00> : vector<1x8xf32>
    %60 = vector.multi_reduction <add>, %59, %cst_24 [2] : vector<1x8x8xf32> to vector<1x8xf32>
    %61 = vector.shape_cast %60 : vector<1x8xf32> to vector<1x8x1xf32>
    %62 = tpu.reciprocal %61 {approx = true} : vector<1x8x1xf32> -> vector<1x8x1xf32>
    %63 = vector.broadcast %62 : vector<1x8x1xf32> to vector<1x8x8xf32>
    %64 = arith.mulf %59, %63 : vector<1x8x8xf32>
    %65 = arith.truncf %64 : vector<1x8x8xf32> to vector<1x8x8xbf16>
    "tpu.trace_start"() <{level = 10 : i32, message = "bqk,bkd->bqd"}> : () -> ()
    %cst_25 = arith.constant dense<0.000000e+00> : vector<1x8x32xf32>
    %66 = tpu.matmul %65, %52, %cst_25 {dimension_numbers = #tpu.dot_dimension_numbers<[2], [1], [1], [2], [0, 0, 0, 1, 1, 2], [0], [0]>} : vector<1x8x8xbf16>, vector<1x8x32xbf16>, vector<1x8x32xf32> -> vector<1x8x32xf32>
    "tpu.trace_stop"() : () -> ()
    %67 = vector.shape_cast %66 : vector<1x8x32xf32> to vector<8x32xf32>
    %68 = vector.extract_strided_slice %42 {offsets = [0, 32], sizes = [8, 32], strides = [1, 1]} : vector<8x128xf32> to vector<8x32xf32>
    %69 = vector.shape_cast %68 : vector<8x32xf32> to vector<1x8x32xf32>
    %70 = arith.truncf %69 : vector<1x8x32xf32> to vector<1x8x32xbf16>
    %71 = vector.extract_strided_slice %43 {offsets = [0, 32], sizes = [8, 32], strides = [1, 1]} : vector<8x256xf32> to vector<8x32xf32>
    %72 = vector.shape_cast %71 : vector<8x32xf32> to vector<1x8x32xf32>
    %73 = arith.truncf %72 : vector<1x8x32xf32> to vector<1x8x32xbf16>
    %74 = vector.extract_strided_slice %43 {offsets = [0, 160], sizes = [8, 32], strides = [1, 1]} : vector<8x256xf32> to vector<8x32xf32>
    %75 = vector.shape_cast %74 : vector<8x32xf32> to vector<1x8x32xf32>
    %76 = arith.truncf %75 : vector<1x8x32xf32> to vector<1x8x32xbf16>
    "tpu.trace_start"() <{level = 10 : i32, message = "bqd,bkd->bqk"}> : () -> ()
    %cst_26 = arith.constant dense<0.000000e+00> : vector<1x8x8xf32>
    %77 = tpu.matmul %70, %73, %cst_26 {dimension_numbers = #tpu.dot_dimension_numbers<[2], [2], [1], [1], [0, 0, 0, 1, 1, 1], [0], [0]>} : vector<1x8x32xbf16>, vector<1x8x32xbf16>, vector<1x8x8xf32> -> vector<1x8x8xf32>
    "tpu.trace_stop"() : () -> ()
    %78 = arith.addf %77, %7 : vector<1x8x8xf32>
    %cst_27 = arith.constant dense<0xFF800000> : vector<1x8xf32>
    %79 = vector.multi_reduction <maximumf>, %78, %cst_27 [2] : vector<1x8x8xf32> to vector<1x8xf32>
    %80 = vector.shape_cast %79 : vector<1x8xf32> to vector<1x8x1xf32>
    %81 = vector.broadcast %80 : vector<1x8x1xf32> to vector<1x8x8xf32>
    %82 = arith.subf %78, %81 : vector<1x8x8xf32>
    %83 = math.exp %82 : vector<1x8x8xf32>
    %cst_28 = arith.constant dense<0.000000e+00> : vector<1x8xf32>
    %84 = vector.multi_reduction <add>, %83, %cst_28 [2] : vector<1x8x8xf32> to vector<1x8xf32>
    %85 = vector.shape_cast %84 : vector<1x8xf32> to vector<1x8x1xf32>
    %86 = tpu.reciprocal %85 {approx = true} : vector<1x8x1xf32> -> vector<1x8x1xf32>
    %87 = vector.broadcast %86 : vector<1x8x1xf32> to vector<1x8x8xf32>
    %88 = arith.mulf %83, %87 : vector<1x8x8xf32>
    %89 = arith.truncf %88 : vector<1x8x8xf32> to vector<1x8x8xbf16>
    "tpu.trace_start"() <{level = 10 : i32, message = "bqk,bkd->bqd"}> : () -> ()
    %cst_29 = arith.constant dense<0.000000e+00> : vector<1x8x32xf32>
    %90 = tpu.matmul %89, %76, %cst_29 {dimension_numbers = #tpu.dot_dimension_numbers<[2], [1], [1], [2], [0, 0, 0, 1, 1, 2], [0], [0]>} : vector<1x8x8xbf16>, vector<1x8x32xbf16>, vector<1x8x32xf32> -> vector<1x8x32xf32>
    "tpu.trace_stop"() : () -> ()
    %91 = vector.shape_cast %90 : vector<1x8x32xf32> to vector<8x32xf32>
    %92 = vector.extract_strided_slice %42 {offsets = [0, 64], sizes = [8, 32], strides = [1, 1]} : vector<8x128xf32> to vector<8x32xf32>
    %93 = vector.shape_cast %92 : vector<8x32xf32> to vector<1x8x32xf32>
    %94 = arith.truncf %93 : vector<1x8x32xf32> to vector<1x8x32xbf16>
    %95 = vector.extract_strided_slice %43 {offsets = [0, 64], sizes = [8, 32], strides = [1, 1]} : vector<8x256xf32> to vector<8x32xf32>
    %96 = vector.shape_cast %95 : vector<8x32xf32> to vector<1x8x32xf32>
    %97 = arith.truncf %96 : vector<1x8x32xf32> to vector<1x8x32xbf16>
    %98 = vector.extract_strided_slice %43 {offsets = [0, 192], sizes = [8, 32], strides = [1, 1]} : vector<8x256xf32> to vector<8x32xf32>
    %99 = vector.shape_cast %98 : vector<8x32xf32> to vector<1x8x32xf32>
    %100 = arith.truncf %99 : vector<1x8x32xf32> to vector<1x8x32xbf16>
    "tpu.trace_start"() <{level = 10 : i32, message = "bqd,bkd->bqk"}> : () -> ()
    %cst_30 = arith.constant dense<0.000000e+00> : vector<1x8x8xf32>
    %101 = tpu.matmul %94, %97, %cst_30 {dimension_numbers = #tpu.dot_dimension_numbers<[2], [2], [1], [1], [0, 0, 0, 1, 1, 1], [0], [0]>} : vector<1x8x32xbf16>, vector<1x8x32xbf16>, vector<1x8x8xf32> -> vector<1x8x8xf32>
    "tpu.trace_stop"() : () -> ()
    %102 = arith.addf %101, %7 : vector<1x8x8xf32>
    %cst_31 = arith.constant dense<0xFF800000> : vector<1x8xf32>
    %103 = vector.multi_reduction <maximumf>, %102, %cst_31 [2] : vector<1x8x8xf32> to vector<1x8xf32>
    %104 = vector.shape_cast %103 : vector<1x8xf32> to vector<1x8x1xf32>
    %105 = vector.broadcast %104 : vector<1x8x1xf32> to vector<1x8x8xf32>
    %106 = arith.subf %102, %105 : vector<1x8x8xf32>
    %107 = math.exp %106 : vector<1x8x8xf32>
    %cst_32 = arith.constant dense<0.000000e+00> : vector<1x8xf32>
    %108 = vector.multi_reduction <add>, %107, %cst_32 [2] : vector<1x8x8xf32> to vector<1x8xf32>
    %109 = vector.shape_cast %108 : vector<1x8xf32> to vector<1x8x1xf32>
    %110 = tpu.reciprocal %109 {approx = true} : vector<1x8x1xf32> -> vector<1x8x1xf32>
    %111 = vector.broadcast %110 : vector<1x8x1xf32> to vector<1x8x8xf32>
    %112 = arith.mulf %107, %111 : vector<1x8x8xf32>
    %113 = arith.truncf %112 : vector<1x8x8xf32> to vector<1x8x8xbf16>
    "tpu.trace_start"() <{level = 10 : i32, message = "bqk,bkd->bqd"}> : () -> ()
    %cst_33 = arith.constant dense<0.000000e+00> : vector<1x8x32xf32>
    %114 = tpu.matmul %113, %100, %cst_33 {dimension_numbers = #tpu.dot_dimension_numbers<[2], [1], [1], [2], [0, 0, 0, 1, 1, 2], [0], [0]>} : vector<1x8x8xbf16>, vector<1x8x32xbf16>, vector<1x8x32xf32> -> vector<1x8x32xf32>
    "tpu.trace_stop"() : () -> ()
    %115 = vector.shape_cast %114 : vector<1x8x32xf32> to vector<8x32xf32>
    %116 = vector.extract_strided_slice %42 {offsets = [0, 96], sizes = [8, 32], strides = [1, 1]} : vector<8x128xf32> to vector<8x32xf32>
    %117 = vector.shape_cast %116 : vector<8x32xf32> to vector<1x8x32xf32>
    %118 = arith.truncf %117 : vector<1x8x32xf32> to vector<1x8x32xbf16>
    %119 = vector.extract_strided_slice %43 {offsets = [0, 96], sizes = [8, 32], strides = [1, 1]} : vector<8x256xf32> to vector<8x32xf32>
    %120 = vector.shape_cast %119 : vector<8x32xf32> to vector<1x8x32xf32>
    %121 = arith.truncf %120 : vector<1x8x32xf32> to vector<1x8x32xbf16>
    %122 = vector.extract_strided_slice %43 {offsets = [0, 224], sizes = [8, 32], strides = [1, 1]} : vector<8x256xf32> to vector<8x32xf32>
    %123 = vector.shape_cast %122 : vector<8x32xf32> to vector<1x8x32xf32>
    %124 = arith.truncf %123 : vector<1x8x32xf32> to vector<1x8x32xbf16>
    "tpu.trace_start"() <{level = 10 : i32, message = "bqd,bkd->bqk"}> : () -> ()
    %cst_34 = arith.constant dense<0.000000e+00> : vector<1x8x8xf32>
    %125 = tpu.matmul %118, %121, %cst_34 {dimension_numbers = #tpu.dot_dimension_numbers<[2], [2], [1], [1], [0, 0, 0, 1, 1, 1], [0], [0]>} : vector<1x8x32xbf16>, vector<1x8x32xbf16>, vector<1x8x8xf32> -> vector<1x8x8xf32>
    "tpu.trace_stop"() : () -> ()
    %126 = arith.addf %125, %7 : vector<1x8x8xf32>
    %cst_35 = arith.constant dense<0xFF800000> : vector<1x8xf32>
    %127 = vector.multi_reduction <maximumf>, %126, %cst_35 [2] : vector<1x8x8xf32> to vector<1x8xf32>
    %128 = vector.shape_cast %127 : vector<1x8xf32> to vector<1x8x1xf32>
    %129 = vector.broadcast %128 : vector<1x8x1xf32> to vector<1x8x8xf32>
    %130 = arith.subf %126, %129 : vector<1x8x8xf32>
    %131 = math.exp %130 : vector<1x8x8xf32>
    %cst_36 = arith.constant dense<0.000000e+00> : vector<1x8xf32>
    %132 = vector.multi_reduction <add>, %131, %cst_36 [2] : vector<1x8x8xf32> to vector<1x8xf32>
    %133 = vector.shape_cast %132 : vector<1x8xf32> to vector<1x8x1xf32>
    %134 = tpu.reciprocal %133 {approx = true} : vector<1x8x1xf32> -> vector<1x8x1xf32>
    %135 = vector.broadcast %134 : vector<1x8x1xf32> to vector<1x8x8xf32>
    %136 = arith.mulf %131, %135 : vector<1x8x8xf32>
    %137 = arith.truncf %136 : vector<1x8x8xf32> to vector<1x8x8xbf16>
    "tpu.trace_start"() <{level = 10 : i32, message = "bqk,bkd->bqd"}> : () -> ()
    %cst_37 = arith.constant dense<0.000000e+00> : vector<1x8x32xf32>
    %138 = tpu.matmul %137, %124, %cst_37 {dimension_numbers = #tpu.dot_dimension_numbers<[2], [1], [1], [2], [0, 0, 0, 1, 1, 2], [0], [0]>} : vector<1x8x8xbf16>, vector<1x8x32xbf16>, vector<1x8x32xf32> -> vector<1x8x32xf32>
    "tpu.trace_stop"() : () -> ()
    %139 = vector.shape_cast %138 : vector<1x8x32xf32> to vector<8x32xf32>
    %140 = tpu.concatenate %67, %91, %115, %139 in 1 : vector<8x32xf32>, vector<8x32xf32>, vector<8x32xf32>, vector<8x32xf32> -> vector<8x128xf32>
    %141 = arith.truncf %140 : vector<8x128xf32> to vector<8x128xbf16>
    %c0_38 = arith.constant 0 : index
    %c0_39 = arith.constant 0 : index
    %c0_40 = arith.constant 0 : index
    %142 = vector.load %arg7[%c0_38, %c0_39, %c0_40] : memref<1x384x128xbf16, #tpu.memory_space<vmem>>, vector<1x128x128xbf16>
    %143 = vector.shape_cast %142 : vector<1x128x128xbf16> to vector<128x128xbf16>
    %cst_41 = arith.constant dense<0.000000e+00> : vector<8x128xf32>
    %144 = tpu.matmul %141, %143, %cst_41 {dimension_numbers = #tpu.dot_dimension_numbers<[1], [0], [0], [1], [0, 0, 1, 1], [], []>} : vector<8x128xbf16>, vector<128x128xbf16>, vector<8x128xf32> -> vector<8x128xf32>
    %145 = vector.extract_strided_slice %5 {offsets = [1, 0], sizes = [1, 128], strides = [1, 1]} : vector<12x384xf32> to vector<1x128xf32>
    %146 = vector.broadcast %145 : vector<1x128xf32> to vector<8x128xf32>
    %147 = arith.addf %144, %146 : vector<8x128xf32>
    %148 = arith.addf %3, %147 : vector<8x128xf32>
    %149 = vector.extract_strided_slice %5 {offsets = [8, 0], sizes = [1, 128], strides = [1, 1]} : vector<12x384xf32> to vector<1x128xf32>
    %150 = vector.extract_strided_slice %5 {offsets = [9, 0], sizes = [1, 128], strides = [1, 1]} : vector<12x384xf32> to vector<1x128xf32>
    %cst_42 = arith.constant dense<0.000000e+00> : vector<8xf32>
    %151 = vector.multi_reduction <add>, %148, %cst_42 [1] : vector<8x128xf32> to vector<8xf32>
    %152 = vector.shape_cast %151 : vector<8xf32> to vector<8x1xf32>
    %cst_43 = arith.constant 3.125000e-02 : f32
    %153 = vector.broadcast %cst_43 : f32 to vector<8x1xf32>
    %154 = arith.mulf %152, %153 : vector<8x1xf32>
    %155 = arith.mulf %148, %148 : vector<8x128xf32>
    %cst_44 = arith.constant dense<0.000000e+00> : vector<8xf32>
    %156 = vector.multi_reduction <add>, %155, %cst_44 [1] : vector<8x128xf32> to vector<8xf32>
    %157 = vector.shape_cast %156 : vector<8xf32> to vector<8x1xf32>
    %cst_45 = arith.constant 3.125000e-02 : f32
    %158 = vector.broadcast %cst_45 : f32 to vector<8x1xf32>
    %159 = arith.mulf %157, %158 : vector<8x1xf32>
    %160 = arith.mulf %154, %154 : vector<8x1xf32>
    %161 = arith.subf %159, %160 : vector<8x1xf32>
    %cst_46 = arith.constant 0.000000e+00 : f32
    %162 = vector.broadcast %cst_46 : f32 to vector<8x1xf32>
    %163 = arith.maximumf %161, %162 : vector<8x1xf32>
    %164 = vector.broadcast %154 : vector<8x1xf32> to vector<8x128xf32>
    %165 = arith.subf %148, %164 : vector<8x128xf32>
    %cst_47 = arith.constant 9.99999974E-6 : f32
    %166 = vector.broadcast %cst_47 : f32 to vector<8x1xf32>
    %167 = arith.addf %163, %166 : vector<8x1xf32>
    %168 = math.rsqrt %167 : vector<8x1xf32>
    %169 = vector.broadcast %168 : vector<8x1xf32> to vector<8x128xf32>
    %170 = arith.mulf %165, %169 : vector<8x128xf32>
    %171 = vector.broadcast %149 : vector<1x128xf32> to vector<8x128xf32>
    %172 = arith.mulf %170, %171 : vector<8x128xf32>
    %173 = vector.broadcast %150 : vector<1x128xf32> to vector<8x128xf32>
    %174 = arith.addf %172, %173 : vector<8x128xf32>
    %175 = arith.truncf %174 : vector<8x128xf32> to vector<8x128xbf16>
    %c0_48 = arith.constant 0 : index
    %c128 = arith.constant 128 : index
    %c0_49 = arith.constant 0 : index
    %176 = vector.load %arg6[%c0_48, %c128, %c0_49] : memref<1x256x384xbf16, #tpu.memory_space<vmem>>, vector<1x128x128xbf16>
    %177 = vector.shape_cast %176 : vector<1x128x128xbf16> to vector<128x128xbf16>
    %cst_50 = arith.constant dense<0.000000e+00> : vector<8x128xf32>
    %178 = tpu.matmul %175, %177, %cst_50 {dimension_numbers = #tpu.dot_dimension_numbers<[1], [0], [0], [1], [0, 0, 1, 1], [], []>} : vector<8x128xbf16>, vector<128x128xbf16>, vector<8x128xf32> -> vector<8x128xf32>
    %179 = vector.extract_strided_slice %5 {offsets = [2, 0], sizes = [1, 128], strides = [1, 1]} : vector<12x384xf32> to vector<1x128xf32>
    %180 = vector.broadcast %179 : vector<1x128xf32> to vector<8x128xf32>
    %181 = arith.addf %178, %180 : vector<8x128xf32>
    %c0_51 = arith.constant 0 : index
    %c128_52 = arith.constant 128 : index
    %c128_53 = arith.constant 128 : index
    %182 = vector.load %arg6[%c0_51, %c128_52, %c128_53] : memref<1x256x384xbf16, #tpu.memory_space<vmem>>, vector<1x128x256xbf16>
    %183 = vector.shape_cast %182 : vector<1x128x256xbf16> to vector<128x256xbf16>
    %cst_54 = arith.constant dense<0.000000e+00> : vector<8x256xf32>
    %184 = tpu.matmul %6, %183, %cst_54 {dimension_numbers = #tpu.dot_dimension_numbers<[1], [0], [0], [1], [0, 0, 1, 1], [], []>} : vector<8x128xbf16>, vector<128x256xbf16>, vector<8x256xf32> -> vector<8x256xf32>
    %185 = vector.extract_strided_slice %5 {offsets = [2, 128], sizes = [1, 256], strides = [1, 1]} : vector<12x384xf32> to vector<1x256xf32>
    %186 = vector.broadcast %185 : vector<1x256xf32> to vector<8x256xf32>
    %187 = arith.addf %184, %186 : vector<8x256xf32>
    %188 = vector.extract_strided_slice %181 {offsets = [0, 0], sizes = [8, 32], strides = [1, 1]} : vector<8x128xf32> to vector<8x32xf32>
    %189 = vector.shape_cast %188 : vector<8x32xf32> to vector<1x8x32xf32>
    %190 = arith.truncf %189 : vector<1x8x32xf32> to vector<1x8x32xbf16>
    %191 = vector.extract_strided_slice %187 {offsets = [0, 0], sizes = [8, 32], strides = [1, 1]} : vector<8x256xf32> to vector<8x32xf32>
    %192 = vector.shape_cast %191 : vector<8x32xf32> to vector<1x8x32xf32>
    %193 = arith.truncf %192 : vector<1x8x32xf32> to vector<1x8x32xbf16>
    %194 = vector.extract_strided_slice %187 {offsets = [0, 128], sizes = [8, 32], strides = [1, 1]} : vector<8x256xf32> to vector<8x32xf32>
    %195 = vector.shape_cast %194 : vector<8x32xf32> to vector<1x8x32xf32>
    %196 = arith.truncf %195 : vector<1x8x32xf32> to vector<1x8x32xbf16>
    "tpu.trace_start"() <{level = 10 : i32, message = "bqd,bkd->bqk"}> : () -> ()
    %cst_55 = arith.constant dense<0.000000e+00> : vector<1x8x8xf32>
    %197 = tpu.matmul %190, %193, %cst_55 {dimension_numbers = #tpu.dot_dimension_numbers<[2], [2], [1], [1], [0, 0, 0, 1, 1, 1], [0], [0]>} : vector<1x8x32xbf16>, vector<1x8x32xbf16>, vector<1x8x8xf32> -> vector<1x8x8xf32>
    "tpu.trace_stop"() : () -> ()
    %198 = arith.addf %197, %8 : vector<1x8x8xf32>
    %cst_56 = arith.constant dense<0xFF800000> : vector<1x8xf32>
    %199 = vector.multi_reduction <maximumf>, %198, %cst_56 [2] : vector<1x8x8xf32> to vector<1x8xf32>
    %200 = vector.shape_cast %199 : vector<1x8xf32> to vector<1x8x1xf32>
    %201 = vector.broadcast %200 : vector<1x8x1xf32> to vector<1x8x8xf32>
    %202 = arith.subf %198, %201 : vector<1x8x8xf32>
    %203 = math.exp %202 : vector<1x8x8xf32>
    %cst_57 = arith.constant dense<0.000000e+00> : vector<1x8xf32>
    %204 = vector.multi_reduction <add>, %203, %cst_57 [2] : vector<1x8x8xf32> to vector<1x8xf32>
    %205 = vector.shape_cast %204 : vector<1x8xf32> to vector<1x8x1xf32>
    %206 = tpu.reciprocal %205 {approx = true} : vector<1x8x1xf32> -> vector<1x8x1xf32>
    %207 = vector.broadcast %206 : vector<1x8x1xf32> to vector<1x8x8xf32>
    %208 = arith.mulf %203, %207 : vector<1x8x8xf32>
    %209 = arith.truncf %208 : vector<1x8x8xf32> to vector<1x8x8xbf16>
    "tpu.trace_start"() <{level = 10 : i32, message = "bqk,bkd->bqd"}> : () -> ()
    %cst_58 = arith.constant dense<0.000000e+00> : vector<1x8x32xf32>
    %210 = tpu.matmul %209, %196, %cst_58 {dimension_numbers = #tpu.dot_dimension_numbers<[2], [1], [1], [2], [0, 0, 0, 1, 1, 2], [0], [0]>} : vector<1x8x8xbf16>, vector<1x8x32xbf16>, vector<1x8x32xf32> -> vector<1x8x32xf32>
    "tpu.trace_stop"() : () -> ()
    %211 = vector.shape_cast %210 : vector<1x8x32xf32> to vector<8x32xf32>
    %212 = vector.extract_strided_slice %181 {offsets = [0, 32], sizes = [8, 32], strides = [1, 1]} : vector<8x128xf32> to vector<8x32xf32>
    %213 = vector.shape_cast %212 : vector<8x32xf32> to vector<1x8x32xf32>
    %214 = arith.truncf %213 : vector<1x8x32xf32> to vector<1x8x32xbf16>
    %215 = vector.extract_strided_slice %187 {offsets = [0, 32], sizes = [8, 32], strides = [1, 1]} : vector<8x256xf32> to vector<8x32xf32>
    %216 = vector.shape_cast %215 : vector<8x32xf32> to vector<1x8x32xf32>
    %217 = arith.truncf %216 : vector<1x8x32xf32> to vector<1x8x32xbf16>
    %218 = vector.extract_strided_slice %187 {offsets = [0, 160], sizes = [8, 32], strides = [1, 1]} : vector<8x256xf32> to vector<8x32xf32>
    %219 = vector.shape_cast %218 : vector<8x32xf32> to vector<1x8x32xf32>
    %220 = arith.truncf %219 : vector<1x8x32xf32> to vector<1x8x32xbf16>
    "tpu.trace_start"() <{level = 10 : i32, message = "bqd,bkd->bqk"}> : () -> ()
    %cst_59 = arith.constant dense<0.000000e+00> : vector<1x8x8xf32>
    %221 = tpu.matmul %214, %217, %cst_59 {dimension_numbers = #tpu.dot_dimension_numbers<[2], [2], [1], [1], [0, 0, 0, 1, 1, 1], [0], [0]>} : vector<1x8x32xbf16>, vector<1x8x32xbf16>, vector<1x8x8xf32> -> vector<1x8x8xf32>
    "tpu.trace_stop"() : () -> ()
    %222 = arith.addf %221, %8 : vector<1x8x8xf32>
    %cst_60 = arith.constant dense<0xFF800000> : vector<1x8xf32>
    %223 = vector.multi_reduction <maximumf>, %222, %cst_60 [2] : vector<1x8x8xf32> to vector<1x8xf32>
    %224 = vector.shape_cast %223 : vector<1x8xf32> to vector<1x8x1xf32>
    %225 = vector.broadcast %224 : vector<1x8x1xf32> to vector<1x8x8xf32>
    %226 = arith.subf %222, %225 : vector<1x8x8xf32>
    %227 = math.exp %226 : vector<1x8x8xf32>
    %cst_61 = arith.constant dense<0.000000e+00> : vector<1x8xf32>
    %228 = vector.multi_reduction <add>, %227, %cst_61 [2] : vector<1x8x8xf32> to vector<1x8xf32>
    %229 = vector.shape_cast %228 : vector<1x8xf32> to vector<1x8x1xf32>
    %230 = tpu.reciprocal %229 {approx = true} : vector<1x8x1xf32> -> vector<1x8x1xf32>
    %231 = vector.broadcast %230 : vector<1x8x1xf32> to vector<1x8x8xf32>
    %232 = arith.mulf %227, %231 : vector<1x8x8xf32>
    %233 = arith.truncf %232 : vector<1x8x8xf32> to vector<1x8x8xbf16>
    "tpu.trace_start"() <{level = 10 : i32, message = "bqk,bkd->bqd"}> : () -> ()
    %cst_62 = arith.constant dense<0.000000e+00> : vector<1x8x32xf32>
    %234 = tpu.matmul %233, %220, %cst_62 {dimension_numbers = #tpu.dot_dimension_numbers<[2], [1], [1], [2], [0, 0, 0, 1, 1, 2], [0], [0]>} : vector<1x8x8xbf16>, vector<1x8x32xbf16>, vector<1x8x32xf32> -> vector<1x8x32xf32>
    "tpu.trace_stop"() : () -> ()
    %235 = vector.shape_cast %234 : vector<1x8x32xf32> to vector<8x32xf32>
    %236 = vector.extract_strided_slice %181 {offsets = [0, 64], sizes = [8, 32], strides = [1, 1]} : vector<8x128xf32> to vector<8x32xf32>
    %237 = vector.shape_cast %236 : vector<8x32xf32> to vector<1x8x32xf32>
    %238 = arith.truncf %237 : vector<1x8x32xf32> to vector<1x8x32xbf16>
    %239 = vector.extract_strided_slice %187 {offsets = [0, 64], sizes = [8, 32], strides = [1, 1]} : vector<8x256xf32> to vector<8x32xf32>
    %240 = vector.shape_cast %239 : vector<8x32xf32> to vector<1x8x32xf32>
    %241 = arith.truncf %240 : vector<1x8x32xf32> to vector<1x8x32xbf16>
    %242 = vector.extract_strided_slice %187 {offsets = [0, 192], sizes = [8, 32], strides = [1, 1]} : vector<8x256xf32> to vector<8x32xf32>
    %243 = vector.shape_cast %242 : vector<8x32xf32> to vector<1x8x32xf32>
    %244 = arith.truncf %243 : vector<1x8x32xf32> to vector<1x8x32xbf16>
    "tpu.trace_start"() <{level = 10 : i32, message = "bqd,bkd->bqk"}> : () -> ()
    %cst_63 = arith.constant dense<0.000000e+00> : vector<1x8x8xf32>
    %245 = tpu.matmul %238, %241, %cst_63 {dimension_numbers = #tpu.dot_dimension_numbers<[2], [2], [1], [1], [0, 0, 0, 1, 1, 1], [0], [0]>} : vector<1x8x32xbf16>, vector<1x8x32xbf16>, vector<1x8x8xf32> -> vector<1x8x8xf32>
    "tpu.trace_stop"() : () -> ()
    %246 = arith.addf %245, %8 : vector<1x8x8xf32>
    %cst_64 = arith.constant dense<0xFF800000> : vector<1x8xf32>
    %247 = vector.multi_reduction <maximumf>, %246, %cst_64 [2] : vector<1x8x8xf32> to vector<1x8xf32>
    %248 = vector.shape_cast %247 : vector<1x8xf32> to vector<1x8x1xf32>
    %249 = vector.broadcast %248 : vector<1x8x1xf32> to vector<1x8x8xf32>
    %250 = arith.subf %246, %249 : vector<1x8x8xf32>
    %251 = math.exp %250 : vector<1x8x8xf32>
    %cst_65 = arith.constant dense<0.000000e+00> : vector<1x8xf32>
    %252 = vector.multi_reduction <add>, %251, %cst_65 [2] : vector<1x8x8xf32> to vector<1x8xf32>
    %253 = vector.shape_cast %252 : vector<1x8xf32> to vector<1x8x1xf32>
    %254 = tpu.reciprocal %253 {approx = true} : vector<1x8x1xf32> -> vector<1x8x1xf32>
    %255 = vector.broadcast %254 : vector<1x8x1xf32> to vector<1x8x8xf32>
    %256 = arith.mulf %251, %255 : vector<1x8x8xf32>
    %257 = arith.truncf %256 : vector<1x8x8xf32> to vector<1x8x8xbf16>
    "tpu.trace_start"() <{level = 10 : i32, message = "bqk,bkd->bqd"}> : () -> ()
    %cst_66 = arith.constant dense<0.000000e+00> : vector<1x8x32xf32>
    %258 = tpu.matmul %257, %244, %cst_66 {dimension_numbers = #tpu.dot_dimension_numbers<[2], [1], [1], [2], [0, 0, 0, 1, 1, 2], [0], [0]>} : vector<1x8x8xbf16>, vector<1x8x32xbf16>, vector<1x8x32xf32> -> vector<1x8x32xf32>
    "tpu.trace_stop"() : () -> ()
    %259 = vector.shape_cast %258 : vector<1x8x32xf32> to vector<8x32xf32>
    %260 = vector.extract_strided_slice %181 {offsets = [0, 96], sizes = [8, 32], strides = [1, 1]} : vector<8x128xf32> to vector<8x32xf32>
    %261 = vector.shape_cast %260 : vector<8x32xf32> to vector<1x8x32xf32>
    %262 = arith.truncf %261 : vector<1x8x32xf32> to vector<1x8x32xbf16>
    %263 = vector.extract_strided_slice %187 {offsets = [0, 96], sizes = [8, 32], strides = [1, 1]} : vector<8x256xf32> to vector<8x32xf32>
    %264 = vector.shape_cast %263 : vector<8x32xf32> to vector<1x8x32xf32>
    %265 = arith.truncf %264 : vector<1x8x32xf32> to vector<1x8x32xbf16>
    %266 = vector.extract_strided_slice %187 {offsets = [0, 224], sizes = [8, 32], strides = [1, 1]} : vector<8x256xf32> to vector<8x32xf32>
    %267 = vector.shape_cast %266 : vector<8x32xf32> to vector<1x8x32xf32>
    %268 = arith.truncf %267 : vector<1x8x32xf32> to vector<1x8x32xbf16>
    "tpu.trace_start"() <{level = 10 : i32, message = "bqd,bkd->bqk"}> : () -> ()
    %cst_67 = arith.constant dense<0.000000e+00> : vector<1x8x8xf32>
    %269 = tpu.matmul %262, %265, %cst_67 {dimension_numbers = #tpu.dot_dimension_numbers<[2], [2], [1], [1], [0, 0, 0, 1, 1, 1], [0], [0]>} : vector<1x8x32xbf16>, vector<1x8x32xbf16>, vector<1x8x8xf32> -> vector<1x8x8xf32>
    "tpu.trace_stop"() : () -> ()
    %270 = arith.addf %269, %8 : vector<1x8x8xf32>
    %cst_68 = arith.constant dense<0xFF800000> : vector<1x8xf32>
    %271 = vector.multi_reduction <maximumf>, %270, %cst_68 [2] : vector<1x8x8xf32> to vector<1x8xf32>
    %272 = vector.shape_cast %271 : vector<1x8xf32> to vector<1x8x1xf32>
    %273 = vector.broadcast %272 : vector<1x8x1xf32> to vector<1x8x8xf32>
    %274 = arith.subf %270, %273 : vector<1x8x8xf32>
    %275 = math.exp %274 : vector<1x8x8xf32>
    %cst_69 = arith.constant dense<0.000000e+00> : vector<1x8xf32>
    %276 = vector.multi_reduction <add>, %275, %cst_69 [2] : vector<1x8x8xf32> to vector<1x8xf32>
    %277 = vector.shape_cast %276 : vector<1x8xf32> to vector<1x8x1xf32>
    %278 = tpu.reciprocal %277 {approx = true} : vector<1x8x1xf32> -> vector<1x8x1xf32>
    %279 = vector.broadcast %278 : vector<1x8x1xf32> to vector<1x8x8xf32>
    %280 = arith.mulf %275, %279 : vector<1x8x8xf32>
    %281 = arith.truncf %280 : vector<1x8x8xf32> to vector<1x8x8xbf16>
    "tpu.trace_start"() <{level = 10 : i32, message = "bqk,bkd->bqd"}> : () -> ()
    %cst_70 = arith.constant dense<0.000000e+00> : vector<1x8x32xf32>
    %282 = tpu.matmul %281, %268, %cst_70 {dimension_numbers = #tpu.dot_dimension_numbers<[2], [1], [1], [2], [0, 0, 0, 1, 1, 2], [0], [0]>} : vector<1x8x8xbf16>, vector<1x8x32xbf16>, vector<1x8x32xf32> -> vector<1x8x32xf32>
    "tpu.trace_stop"() : () -> ()
    %283 = vector.shape_cast %282 : vector<1x8x32xf32> to vector<8x32xf32>
    %284 = tpu.concatenate %211, %235, %259, %283 in 1 : vector<8x32xf32>, vector<8x32xf32>, vector<8x32xf32>, vector<8x32xf32> -> vector<8x128xf32>
    %285 = arith.truncf %284 : vector<8x128xf32> to vector<8x128xbf16>
    %c0_71 = arith.constant 0 : index
    %c128_72 = arith.constant 128 : index
    %c0_73 = arith.constant 0 : index
    %286 = vector.load %arg7[%c0_71, %c128_72, %c0_73] : memref<1x384x128xbf16, #tpu.memory_space<vmem>>, vector<1x128x128xbf16>
    %287 = vector.shape_cast %286 : vector<1x128x128xbf16> to vector<128x128xbf16>
    %cst_74 = arith.constant dense<0.000000e+00> : vector<8x128xf32>
    %288 = tpu.matmul %285, %287, %cst_74 {dimension_numbers = #tpu.dot_dimension_numbers<[1], [0], [0], [1], [0, 0, 1, 1], [], []>} : vector<8x128xbf16>, vector<128x128xbf16>, vector<8x128xf32> -> vector<8x128xf32>
    %289 = vector.extract_strided_slice %5 {offsets = [3, 0], sizes = [1, 128], strides = [1, 1]} : vector<12x384xf32> to vector<1x128xf32>
    %290 = vector.broadcast %289 : vector<1x128xf32> to vector<8x128xf32>
    %291 = arith.addf %288, %290 : vector<8x128xf32>
    %292 = arith.addf %148, %291 : vector<8x128xf32>
    %293 = vector.extract_strided_slice %5 {offsets = [10, 0], sizes = [1, 128], strides = [1, 1]} : vector<12x384xf32> to vector<1x128xf32>
    %294 = vector.extract_strided_slice %5 {offsets = [11, 0], sizes = [1, 128], strides = [1, 1]} : vector<12x384xf32> to vector<1x128xf32>
    %cst_75 = arith.constant dense<0.000000e+00> : vector<8xf32>
    %295 = vector.multi_reduction <add>, %292, %cst_75 [1] : vector<8x128xf32> to vector<8xf32>
    %296 = vector.shape_cast %295 : vector<8xf32> to vector<8x1xf32>
    %cst_76 = arith.constant 3.125000e-02 : f32
    %297 = vector.broadcast %cst_76 : f32 to vector<8x1xf32>
    %298 = arith.mulf %296, %297 : vector<8x1xf32>
    %299 = arith.mulf %292, %292 : vector<8x128xf32>
    %cst_77 = arith.constant dense<0.000000e+00> : vector<8xf32>
    %300 = vector.multi_reduction <add>, %299, %cst_77 [1] : vector<8x128xf32> to vector<8xf32>
    %301 = vector.shape_cast %300 : vector<8xf32> to vector<8x1xf32>
    %cst_78 = arith.constant 3.125000e-02 : f32
    %302 = vector.broadcast %cst_78 : f32 to vector<8x1xf32>
    %303 = arith.mulf %301, %302 : vector<8x1xf32>
    %304 = arith.mulf %298, %298 : vector<8x1xf32>
    %305 = arith.subf %303, %304 : vector<8x1xf32>
    %cst_79 = arith.constant 0.000000e+00 : f32
    %306 = vector.broadcast %cst_79 : f32 to vector<8x1xf32>
    %307 = arith.maximumf %305, %306 : vector<8x1xf32>
    %308 = vector.broadcast %298 : vector<8x1xf32> to vector<8x128xf32>
    %309 = arith.subf %292, %308 : vector<8x128xf32>
    %cst_80 = arith.constant 9.99999974E-6 : f32
    %310 = vector.broadcast %cst_80 : f32 to vector<8x1xf32>
    %311 = arith.addf %307, %310 : vector<8x1xf32>
    %312 = math.rsqrt %311 : vector<8x1xf32>
    %313 = vector.broadcast %312 : vector<8x1xf32> to vector<8x128xf32>
    %314 = arith.mulf %309, %313 : vector<8x128xf32>
    %315 = vector.broadcast %293 : vector<1x128xf32> to vector<8x128xf32>
    %316 = arith.mulf %314, %315 : vector<8x128xf32>
    %317 = vector.broadcast %294 : vector<1x128xf32> to vector<8x128xf32>
    %318 = arith.addf %316, %317 : vector<8x128xf32>
    %319 = arith.truncf %318 : vector<8x128xf32> to vector<8x128xbf16>
    %c0_81 = arith.constant 0 : index
    %c0_82 = arith.constant 0 : index
    %c0_83 = arith.constant 0 : index
    %320 = vector.load %arg8[%c0_81, %c0_82, %c0_83] : memref<1x128x128xbf16, #tpu.memory_space<vmem>>, vector<1x128x128xbf16>
    %321 = vector.shape_cast %320 : vector<1x128x128xbf16> to vector<128x128xbf16>
    %cst_84 = arith.constant dense<0.000000e+00> : vector<8x128xf32>
    %322 = tpu.matmul %319, %321, %cst_84 {dimension_numbers = #tpu.dot_dimension_numbers<[1], [0], [0], [1], [0, 0, 1, 1], [], []>} : vector<8x128xbf16>, vector<128x128xbf16>, vector<8x128xf32> -> vector<8x128xf32>
    %323 = vector.extract_strided_slice %5 {offsets = [4, 0], sizes = [1, 128], strides = [1, 1]} : vector<12x384xf32> to vector<1x128xf32>
    %324 = vector.broadcast %323 : vector<1x128xf32> to vector<8x128xf32>
    %325 = arith.addf %322, %324 : vector<8x128xf32>
    %cst_85 = arith.constant 0.000000e+00 : f32
    %326 = vector.broadcast %cst_85 : f32 to vector<8x128xf32>
    %327 = arith.maximumf %325, %326 : vector<8x128xf32>
    %328 = arith.truncf %327 : vector<8x128xf32> to vector<8x128xbf16>
    %c0_86 = arith.constant 0 : index
    %c256 = arith.constant 256 : index
    %c0_87 = arith.constant 0 : index
    %329 = vector.load %arg7[%c0_86, %c256, %c0_87] : memref<1x384x128xbf16, #tpu.memory_space<vmem>>, vector<1x128x128xbf16>
    %330 = vector.shape_cast %329 : vector<1x128x128xbf16> to vector<128x128xbf16>
    %cst_88 = arith.constant dense<0.000000e+00> : vector<8x128xf32>
    %331 = tpu.matmul %328, %330, %cst_88 {dimension_numbers = #tpu.dot_dimension_numbers<[1], [0], [0], [1], [0, 0, 1, 1], [], []>} : vector<8x128xbf16>, vector<128x128xbf16>, vector<8x128xf32> -> vector<8x128xf32>
    %332 = vector.extract_strided_slice %5 {offsets = [5, 0], sizes = [1, 128], strides = [1, 1]} : vector<12x384xf32> to vector<1x128xf32>
    %333 = vector.broadcast %332 : vector<1x128xf32> to vector<8x128xf32>
    %334 = arith.addf %331, %333 : vector<8x128xf32>
    %335 = arith.addf %291, %334 : vector<8x128xf32>
    %c0_89 = arith.constant 0 : index
    %c0_90 = arith.constant 0 : index
    %336 = vector.load %arg11[%c0_89, %c0_90] : memref<8x128xf32, #tpu.memory_space<vmem>>, vector<8x128xf32>
    tpu.vector_store %arg11[%c0_89, %c0_90], %335 {strides = array<i32>} : memref<8x128xf32, #tpu.memory_space<vmem>>, vector<8x128xf32>,
    %c1_i32 = arith.constant 1 : i32
    %337 = arith.cmpi eq, %arg1, %c1_i32 : i32
    %338 = arith.extui %337 : i1 to i32
    %c0_i32_91 = arith.constant 0 : i32
    %339 = arith.cmpi ne, %338, %c0_i32_91 : i32
    scf.if %339 {
      %c0_92 = arith.constant 0 : index
      %c0_93 = arith.constant 0 : index
      %340 = vector.load %arg10[%c0_92, %c0_93] : memref<8x128xf32, #tpu.memory_space<vmem>>, vector<8x128xf32>
      tpu.vector_store %arg10[%c0_92, %c0_93], %335 {strides = array<i32>} : memref<8x128xf32, #tpu.memory_space<vmem>>, vector<8x128xf32>,
    } else {
    }
    return
  }
  func.func @transform_0(%arg0: i32, %arg1: i32) -> (i32, i32) {
    %c0_i32 = arith.constant 0 : i32
    %c0_i32_0 = arith.constant 0 : i32
    return %arg0, %c0_i32 : i32, i32
  }
  func.func @transform_1(%arg0: i32, %arg1: i32) -> (i32, i32) {
    %c0_i32 = arith.constant 0 : i32
    %c0_i32_0 = arith.constant 0 : i32
    return %arg0, %c0_i32 : i32, i32
  }
  func.func @transform_2(%arg0: i32, %arg1: i32) -> (i32, i32, i32) {
    %c0_i32 = arith.constant 0 : i32
    %c0_i32_0 = arith.constant 0 : i32
    %c0_i32_1 = arith.constant 0 : i32
    return %arg0, %c0_i32, %c0_i32_0 : i32, i32, i32
  }
  func.func @transform_3(%arg0: i32, %arg1: i32) -> (i32, i32, i32) {
    %c0_i32 = arith.constant 0 : i32
    %c0_i32_0 = arith.constant 0 : i32
    %c0_i32_1 = arith.constant 0 : i32
    return %arg0, %c0_i32, %c0_i32_0 : i32, i32, i32
  }
  func.func @transform_4(%arg0: i32, %arg1: i32) -> (i32, i32, i32) {
    %c0_i32 = arith.constant 0 : i32
    %c0_i32_0 = arith.constant 0 : i32
    %c0_i32_1 = arith.constant 0 : i32
    return %arg1, %c0_i32, %c0_i32_0 : i32, i32, i32
  }
  func.func @transform_5(%arg0: i32, %arg1: i32) -> (i32, i32, i32) {
    %c0_i32 = arith.constant 0 : i32
    %c0_i32_0 = arith.constant 0 : i32
    %c0_i32_1 = arith.constant 0 : i32
    return %arg1, %c0_i32, %c0_i32_0 : i32, i32, i32
  }
  func.func @transform_6(%arg0: i32, %arg1: i32) -> (i32, i32, i32) {
    %c0_i32 = arith.constant 0 : i32
    %c0_i32_0 = arith.constant 0 : i32
    %c0_i32_1 = arith.constant 0 : i32
    return %arg1, %c0_i32, %c0_i32_0 : i32, i32, i32
  }
  func.func @transform_7(%arg0: i32, %arg1: i32) -> (i32, i32, i32) {
    %c0_i32 = arith.constant 0 : i32
    %c0_i32_0 = arith.constant 0 : i32
    %c0_i32_1 = arith.constant 0 : i32
    return %arg1, %c0_i32, %c0_i32_0 : i32, i32, i32
  }
  func.func @transform_8(%arg0: i32, %arg1: i32) -> (i32, i32) {
    %c0_i32 = arith.constant 0 : i32
    %c0_i32_0 = arith.constant 0 : i32
    return %arg0, %c0_i32 : i32, i32
  }
}

</mosaic_0001>

<llo_original>
// kernel: tpu_custom_call.1
$region0: #{tpu_custom_call.1}
  #allocation0 [shape = 'u32[]', space=smem, size = 0x4, offset = 0x4, fixed_abs, tag = 'smem constant byte address 0x4 - core index']
  #allocation1 [shape = 'u32[72,128]{1,0:T(1,128)}', space=vmem, size = 0x9000, scoped, tag = 'internal scratch']
  #allocation2 [shape = 'f32[8,128]{1,0:T(8,128)}', space=vmem, size = 0x1000, scoped, tag = 'scratch operand']
  %s0 = inlined_call_operand.vmem [shape: f32[16,128], index: 0, kind: input, shape index: {}]
  %s1 = inlined_call_operand.vmem [shape: bf16[16,128], index: 1, kind: input, shape index: {}]
  %s2 = inlined_call_operand.vmem [shape: f32[2,8,8], index: 2, kind: input, shape index: {}]
  %s3 = inlined_call_operand.hbm [shape: f32[2,8,8], index: 3, kind: input, shape index: {}]
  %s4 = inlined_call_operand.hbm [shape: bf16[2,256,384], index: 4, kind: input, shape index: {}]
  %s5 = inlined_call_operand.hbm [shape: bf16[2,384,128], index: 5, kind: input, shape index: {}]
  %s6 = inlined_call_operand.vmem [shape: bf16[2,128,128], index: 6, kind: input, shape index: {}]
  %s7 = inlined_call_operand.vmem [shape: f32[2,12,384], index: 7, kind: input, shape index: {}]
  %s8 = inlined_call_operand.hbm [shape: f32[16,128], index: 8, kind: output, shape index: {}]
  %s9 = sld [smem:[#allocation0]]
  $region85: #{tpu_custom_call.1} parent=0
    _
  %s11 = ssub.s32 1, %s9
  %s12 = scalar_select 0, %s11, %s9
  $region1: #{tpu_custom_call.1} parent=0
    #allocation3 [shape = 'u8[8192]{0}', space=vmem, size = 0x2000, scoped, tag = 'input window, operand 3']
    #allocation4 [shape = 's32[2]{0}', space=sflag, size = 0x8, scoped, tag = 'scoped memory for tpu_custom_call.1']
    #allocation5 [shape = 's32[2]{0}', space=sflag, size = 0x8, scoped, tag = 'scoped memory for tpu_custom_call.1']
    #allocation6 [shape = 'u8[393216]{0}', space=vmem, size = 0x60000, scoped, tag = 'input window, operand 4']
    #allocation7 [shape = 's32[2]{0}', space=sflag, size = 0x8, scoped, tag = 'scoped memory for tpu_custom_call.1']
    #allocation8 [shape = 'u8[196608]{0}', space=vmem, size = 0x30000, scoped, tag = 'input window, operand 5']
    #allocation9 [shape = 'u8[8192]{0}', space=vmem, size = 0x2000, scoped, tag = 'output window, operand 0']
    %13 = vsyncpa [#allocation4], 0
    %s14 = scalar_lea.sflag [#allocation4], 1
    %15 = vsyncpa %s14, 0
    %16 = vsyncpa [#allocation7], 0
    %s17 = scalar_lea.sflag [#allocation7], 1
    %18 = vsyncpa %s17, 0
    %19 = vsyncpa [#allocation5], 0
    %s20 = scalar_lea.sflag [#allocation5], 1
    %21 = vsyncpa %s20, 0
    loop: start=0, step=1, limit=6
    $region2: #{tpu_custom_call.1} parent=1 // loop_pre_header
      _
    $region3: #{tpu_custom_call.1} parent=1 // loop_header
      %s23 = sphi 0, %s27
      %p24 = scmp.ge.s32.totalorder %s23, 6
      %s30 = sphi 0, %s42
      %s31 = sphi 0, %s38
      %s32 = sphi 0, %s30
      %s33 = sphi 0, %s31
      %s34 = sphi 0, %s32
      %s35 = sphi 0, %s33
      %s45 = sphi 0, %s47
      %s48 = sphi 0, %s45
      %s49 = sphi 0, %s48
      %s65 = sphi 0, %s49
      %s71 = sphi 0, %s73
      %s74 = sphi 0, %s71
      %s75 = sphi 0, %s74
      %s91 = sphi 0, %s75
      %s97 = sphi 0, %s99
      %s100 = sphi 0, %s97
      %s101 = sphi 0, %s100
      %s117 = sphi 0, %s101
      %s123 = sphi 0, %s125
      %s126 = sphi 0, %s123
      %s127 = sphi 0, %s126
      %s143 = sphi 0, %s127
      %s149 = sphi 0, %s151
      %s152 = sphi 0, %s149
      %s153 = sphi 0, %s152
      %s169 = sphi 0, %s153
      %s175 = sphi 0, %s177
      %s178 = sphi 0, %s175
      %s179 = sphi 0, %s178
      %s195 = sphi 0, %s179
      %s201 = sphi 0, %s203
      %s204 = sphi 0, %s201
      %s205 = sphi 0, %s204
      %s221 = sphi 0, %s205
      %s227 = sphi 0, %s229
      %s230 = sphi 0, %s227
      %s231 = sphi 0, %s230
      %s247 = sphi 0, %s231
      %s253 = sphi 0, %s255
      %s256 = sphi 0, %s253
      %s257 = sphi 0, %s256
      %s273 = sphi 0, %s257
    $region4: #{tpu_custom_call.1} parent=1 // loop_header_branch
      %26 = sbr.rel (%p24) target = $region8
    $region5: #{tpu_custom_call.1} parent=1 // loop_body
      %s28 = ssub.s32 %s23, 1
      %s29 = ssub.s32 %s23, 2
      %s36 = sadd.s32 1, %s31
      %p37 = scmp.ge.s32.totalorder %s36, 2
      %s38 = scalar_select %p37, 0, %s36
      %s39 = sadd.s32 1, %s30
      %s40 = scalar_select %p37, %s39, %s30
      %p41 = scmp.ge.s32.totalorder %s40, 2
      %s42 = scalar_select %p41, 0, %s40
      %s43 = ssub.s32 %s30, %s42
      %p44 = scmp.eq.s32.totalorder %s43, 0
      %s46 = sadd.s32 %s45, 1
      %s47 = scalar_select %p44, %s45, %s46
      %p50 = pneg %p44
      %p51 = scmp.eq.s32.totalorder %s23, 3
      %p52 = por %p50, %p51
      %p53 = scmp.ne.s32.totalorder %s45, %s48
      %p54 = scmp.eq.s32.totalorder %s23, 0
      %p55 = por %p53, %p54
      %p56 = scmp.ne.s32.totalorder %s45, %s48
      %p57 = scmp.eq.s32.totalorder %s28, 3
      %p58 = por %p56, %p57
      %p59 = scmp.ne.s32.totalorder %s48, %s49
      %p60 = scmp.eq.s32.totalorder %s28, 0
      %p61 = por %p59, %p60
      %p62 = scmp.ne.s32.totalorder %s48, %s49
      %p63 = scmp.eq.s32.totalorder %s29, 3
      %p64 = por %p62, %p63
      %p66 = scmp.ne.s32.totalorder %s49, %s65
      %p67 = scmp.eq.s32.totalorder %s29, 0
      %p68 = por %p66, %p67
      %s69 = ssub.s32 %s30, %s42
      %p70 = scmp.eq.s32.totalorder %s69, 0
      %s72 = sadd.s32 %s71, 1
      %s73 = scalar_select %p70, %s71, %s72
      %p76 = pneg %p70
      %p77 = scmp.eq.s32.totalorder %s23, 3
      %p78 = por %p76, %p77
      %p79 = scmp.ne.s32.totalorder %s71, %s74
      %p80 = scmp.eq.s32.totalorder %s23, 0
      %p81 = por %p79, %p80
      %p82 = scmp.ne.s32.totalorder %s71, %s74
      %p83 = scmp.eq.s32.totalorder %s28, 3
      %p84 = por %p82, %p83
      %p85 = scmp.ne.s32.totalorder %s74, %s75
      %p86 = scmp.eq.s32.totalorder %s28, 0
      %p87 = por %p85, %p86
      %p88 = scmp.ne.s32.totalorder %s74, %s75
      %p89 = scmp.eq.s32.totalorder %s29, 3
      %p90 = por %p88, %p89
      %p92 = scmp.ne.s32.totalorder %s75, %s91
      %p93 = scmp.eq.s32.totalorder %s29, 0
      %p94 = por %p92, %p93
      %s95 = ssub.s32 %s30, %s42
      %p96 = scmp.eq.s32.totalorder %s95, 0
      %s98 = sadd.s32 %s97, 1
      %s99 = scalar_select %p96, %s97, %s98
      %p102 = pneg %p96
      %p103 = scmp.eq.s32.totalorder %s23, 3
      %p104 = por %p102, %p103
      %p105 = scmp.ne.s32.totalorder %s97, %s100
      %p106 = scmp.eq.s32.totalorder %s23, 0
      %p107 = por %p105, %p106
      %p108 = scmp.ne.s32.totalorder %s97, %s100
      %p109 = scmp.eq.s32.totalorder %s28, 3
      %p110 = por %p108, %p109
      %p111 = scmp.ne.s32.totalorder %s100, %s101
      %p112 = scmp.eq.s32.totalorder %s28, 0
      %p113 = por %p111, %p112
      %p114 = scmp.ne.s32.totalorder %s100, %s101
      %p115 = scmp.eq.s32.totalorder %s29, 3
      %p116 = por %p114, %p115
      %p118 = scmp.ne.s32.totalorder %s101, %s117
      %p119 = scmp.eq.s32.totalorder %s29, 0
      %p120 = por %p118, %p119
      %s121 = ssub.s32 %s30, %s42
      %p122 = scmp.eq.s32.totalorder %s121, 0
      %s124 = sadd.s32 %s123, 1
      %s125 = scalar_select %p122, %s123, %s124
      %p128 = pneg %p122
      %p129 = scmp.eq.s32.totalorder %s23, 3
      %p130 = por %p128, %p129
      %p131 = scmp.ne.s32.totalorder %s123, %s126
      %p132 = scmp.eq.s32.totalorder %s23, 0
      %p133 = por %p131, %p132
      %p134 = scmp.ne.s32.totalorder %s123, %s126
      %p135 = scmp.eq.s32.totalorder %s28, 3
      %p136 = por %p134, %p135
      %p137 = scmp.ne.s32.totalorder %s126, %s127
      %p138 = scmp.eq.s32.totalorder %s28, 0
      %p139 = por %p137, %p138
      %p140 = scmp.ne.s32.totalorder %s126, %s127
      %p141 = scmp.eq.s32.totalorder %s29, 3
      %p142 = por %p140, %p141
      %p144 = scmp.ne.s32.totalorder %s127, %s143
      %p145 = scmp.eq.s32.totalorder %s29, 0
      %p146 = por %p144, %p145
      %s147 = ssub.s32 %s31, %s38
      %p148 = scmp.eq.s32.totalorder %s147, 0
      %s150 = sadd.s32 %s149, 1
      %s151 = scalar_select %p148, %s149, %s150
      %p154 = pneg %p148
      %p155 = scmp.eq.s32.totalorder %s23, 3
      %p156 = por %p154, %p155
      %p157 = scmp.ne.s32.totalorder %s149, %s152
      %p158 = scmp.eq.s32.totalorder %s23, 0
      %p159 = por %p157, %p158
      %p160 = scmp.ne.s32.totalorder %s149, %s152
      %p161 = scmp.eq.s32.totalorder %s28, 3
      %p162 = por %p160, %p161
      %p163 = scmp.ne.s32.totalorder %s152, %s153
      %p164 = scmp.eq.s32.totalorder %s28, 0
      %p165 = por %p163, %p164
      %p166 = scmp.ne.s32.totalorder %s152, %s153
      %p167 = scmp.eq.s32.totalorder %s29, 3
      %p168 = por %p166, %p167
      %p170 = scmp.ne.s32.totalorder %s153, %s169
      %p171 = scmp.eq.s32.totalorder %s29, 0
      %p172 = por %p170, %p171
      %s173 = ssub.s32 %s31, %s38
      %p174 = scmp.eq.s32.totalorder %s173, 0
      %s176 = sadd.s32 %s175, 1
      %s177 = scalar_select %p174, %s175, %s176
      %p180 = pneg %p174
      %p181 = scmp.eq.s32.totalorder %s23, 3
      %p182 = por %p180, %p181
      %p183 = scmp.ne.s32.totalorder %s175, %s178
      %p184 = scmp.eq.s32.totalorder %s23, 0
      %p185 = por %p183, %p184
      %p186 = scmp.ne.s32.totalorder %s175, %s178
      %p187 = scmp.eq.s32.totalorder %s28, 3
      %p188 = por %p186, %p187
      %p189 = scmp.ne.s32.totalorder %s178, %s179
      %p190 = scmp.eq.s32.totalorder %s28, 0
      %p191 = por %p189, %p190
      %p192 = scmp.ne.s32.totalorder %s178, %s179
      %p193 = scmp.eq.s32.totalorder %s29, 3
      %p194 = por %p192, %p193
      %p196 = scmp.ne.s32.totalorder %s179, %s195
      %p197 = scmp.eq.s32.totalorder %s29, 0
      %p198 = por %p196, %p197
      %s199 = ssub.s32 %s31, %s38
      %p200 = scmp.eq.s32.totalorder %s199, 0
      %s202 = sadd.s32 %s201, 1
      %s203 = scalar_select %p200, %s201, %s202
      %p206 = pneg %p200
      %p207 = scmp.eq.s32.totalorder %s23, 3
      %p208 = por %p206, %p207
      %p209 = scmp.ne.s32.totalorder %s201, %s204
      %p210 = scmp.eq.s32.totalorder %s23, 0
      %p211 = por %p209, %p210
      %p212 = scmp.ne.s32.totalorder %s201, %s204
      %p213 = scmp.eq.s32.totalorder %s28, 3
      %p214 = por %p212, %p213
      %p215 = scmp.ne.s32.totalorder %s204, %s205
      %p216 = scmp.eq.s32.totalorder %s28, 0
      %p217 = por %p215, %p216
      %p218 = scmp.ne.s32.totalorder %s204, %s205
      %p219 = scmp.eq.s32.totalorder %s29, 3
      %p220 = por %p218, %p219
      %p222 = scmp.ne.s32.totalorder %s205, %s221
      %p223 = scmp.eq.s32.totalorder %s29, 0
      %p224 = por %p222, %p223
      %s225 = ssub.s32 %s31, %s38
      %p226 = scmp.eq.s32.totalorder %s225, 0
      %s228 = sadd.s32 %s227, 1
      %s229 = scalar_select %p226, %s227, %s228
      %p232 = pneg %p226
      %p233 = scmp.eq.s32.totalorder %s23, 3
      %p234 = por %p232, %p233
      %p235 = scmp.ne.s32.totalorder %s227, %s230
      %p236 = scmp.eq.s32.totalorder %s23, 0
      %p237 = por %p235, %p236
      %p238 = scmp.ne.s32.totalorder %s227, %s230
      %p239 = scmp.eq.s32.totalorder %s28, 3
      %p240 = por %p238, %p239
      %p241 = scmp.ne.s32.totalorder %s230, %s231
      %p242 = scmp.eq.s32.totalorder %s28, 0
      %p243 = por %p241, %p242
      %p244 = scmp.ne.s32.totalorder %s230, %s231
      %p245 = scmp.eq.s32.totalorder %s29, 3
      %p246 = por %p244, %p245
      %p248 = scmp.ne.s32.totalorder %s231, %s247
      %p249 = scmp.eq.s32.totalorder %s29, 0
      %p250 = por %p248, %p249
      %s251 = ssub.s32 %s30, %s42
      %p252 = scmp.eq.s32.totalorder %s251, 0
      %s254 = sadd.s32 %s253, 1
      %s255 = scalar_select %p252, %s253, %s254
      %p258 = pneg %p252
      %p259 = scmp.eq.s32.totalorder %s23, 3
      %p260 = por %p258, %p259
      %p261 = scmp.ne.s32.totalorder %s253, %s256
      %p262 = scmp.eq.s32.totalorder %s23, 0
      %p263 = por %p261, %p262
      %p264 = scmp.ne.s32.totalorder %s253, %s256
      %p265 = scmp.eq.s32.totalorder %s28, 3
      %p266 = por %p264, %p265
      %p267 = scmp.ne.s32.totalorder %s256, %s257
      %p268 = scmp.eq.s32.totalorder %s28, 0
      %p269 = por %p267, %p268
      %p270 = scmp.ne.s32.totalorder %s256, %s257
      %p271 = scmp.eq.s32.totalorder %s29, 3
      %p272 = por %p270, %p271
      %p274 = scmp.ne.s32.totalorder %s257, %s273
      %p275 = scmp.eq.s32.totalorder %s29, 0
      %p276 = por %p274, %p275
      %p277 = scmp.le.s32.totalorder 1, %s23
      %p278 = scmp.lt.s32.totalorder %s23, 5
      %p279 = pnand %p277, %p278
      %p280 = pneg %p279
      // Predicated region
      $region9: #{tpu_custom_call.1} parent=5 // pred_check
        _
      $region10: #{tpu_custom_call.1} parent=5 // pred_check_branch
        %282 = sbr.rel (%p279) target = $region12
      $region11: #{tpu_custom_call.1} parent=5 // pred_region
        %s283 = ssub.s32 %s23, 1
      $region12: #{tpu_custom_call.1} parent=5 // pred_fallthru
        _
      %p284 = scmp.lt.s32.totalorder %s23, 4
      // Predicated region
      $region13: #{tpu_custom_call.1} parent=5 // pred_check
        %p285 = pneg %p284
      $region14: #{tpu_custom_call.1} parent=5 // pred_check_branch
        %287 = sbr.rel (%p285) target = $region16
      $region15: #{tpu_custom_call.1} parent=5 // pred_region
        // Predicated region
        $region17: #{tpu_custom_call.1} parent=15 // pred_check
          %p288 = pneg %p55
        $region18: #{tpu_custom_call.1} parent=15 // pred_check_branch
          %290 = sbr.rel (%p288) target = $region20
        $region19: #{tpu_custom_call.1} parent=15 // pred_region
          %p291 = scmp.lt.s32.totalorder %s30, 1
          %s292 = scalar_select %p291, %s30, 1
          %s293 = smul.addr %s292, 8
          %s294 = scalar_lea.vmem %s0, %s293
        $region20: #{tpu_custom_call.1} parent=15 // pred_fallthru
          _
        // Predicated region
        $region21: #{tpu_custom_call.1} parent=15 // pred_check
          %p295 = pneg %p81
        $region22: #{tpu_custom_call.1} parent=15 // pred_check_branch
          %297 = sbr.rel (%p295) target = $region24
        $region23: #{tpu_custom_call.1} parent=15 // pred_region
          %p298 = scmp.lt.s32.totalorder %s30, 1
          %s299 = scalar_select %p298, %s30, 1
          %s300 = smul.addr %s299, 4
          %s301 = scalar_lea.vmem %s1, %s300
        $region24: #{tpu_custom_call.1} parent=15 // pred_fallthru
          _
        // Predicated region
        $region25: #{tpu_custom_call.1} parent=15 // pred_check
          %p302 = pneg %p107
        $region26: #{tpu_custom_call.1} parent=15 // pred_check_branch
          %304 = sbr.rel (%p302) target = $region28
        $region27: #{tpu_custom_call.1} parent=15 // pred_region
          %p305 = scmp.lt.s32.totalorder %s30, 1
          %s306 = scalar_select %p305, %s30, 1
          %s307 = smul.addr %s306, 8
          %s308 = scalar_lea.vmem %s2, %s307
        $region28: #{tpu_custom_call.1} parent=15 // pred_fallthru
          _
        // Predicated region
        $region29: #{tpu_custom_call.1} parent=15 // pred_check
          %p309 = pneg %p133
        $region30: #{tpu_custom_call.1} parent=15 // pred_check_branch
          %311 = sbr.rel (%p309) target = $region32
        $region31: #{tpu_custom_call.1} parent=15 // pred_region
          %s312 = sand.u32 %s123, 1
          %s313 = scalar_lea.sflag [#allocation4], %s312
          %s314 = sand.u32 %s123, 1
          %s315 = smul.addr %s314, 8
          %s316 = scalar_lea.vmem [#allocation3], %s315
          %318 = vsyncadd %s313, 0
          %s319 = smul.addr %s30, 8
          %s320 = scalar_lea.hbm %s3, %s319
          %s322 = sshll.u32 %s320, 4
          %s323 = int_to_ptr.hbm [resolvable:$true] %s322
          %s324 = sshll.u32 %s316, 4
          %s325 = int_to_ptr.vmem [resolvable:$true] %s324
          %327 = dma.hbm_to_vmem [thread:$0]  %s323, 128, %s325, %s313
        $region32: #{tpu_custom_call.1} parent=15 // pred_fallthru
          _
        // Predicated region
        $region33: #{tpu_custom_call.1} parent=15 // pred_check
          %p328 = pneg %p159
        $region34: #{tpu_custom_call.1} parent=15 // pred_check_branch
          %330 = sbr.rel (%p328) target = $region36
        $region35: #{tpu_custom_call.1} parent=15 // pred_region
          %s331 = sand.u32 %s23, 1
          %s332 = scalar_lea.sflag [#allocation7], %s331
          %s333 = sand.u32 %s149, 1
          %s334 = smul.addr %s333, 384
          %s335 = scalar_lea.vmem [#allocation6], %s334
          %337 = vsyncadd %s332, 0
          %s338 = smul.addr %s31, 96
          %s339 = smul.addr %s338, 4
          %s340 = scalar_lea.hbm %s4, %s339
          %s341 = sshll.u32 %s340, 4
          %s342 = int_to_ptr.hbm [resolvable:$true] %s341
          %s343 = sshll.u32 %s335, 4
          %s344 = int_to_ptr.vmem [resolvable:$true] %s343
          %349 = dma.hbm_to_vmem [thread:$0]  %s342, 6144, %s344, %s332, 192, 192, 12
        $region36: #{tpu_custom_call.1} parent=15 // pred_fallthru
          _
        // Predicated region
        $region37: #{tpu_custom_call.1} parent=15 // pred_check
          %p350 = pneg %p185
        $region38: #{tpu_custom_call.1} parent=15 // pred_check_branch
          %352 = sbr.rel (%p350) target = $region40
        $region39: #{tpu_custom_call.1} parent=15 // pred_region
          %s353 = sand.u32 %s23, 1
          %s354 = scalar_lea.sflag [#allocation7], %s353
          %s355 = sand.u32 %s175, 1
          %s356 = smul.addr %s355, 192
          %s357 = scalar_lea.vmem [#allocation8], %s356
          %359 = vsyncadd %s354, 0
          %s360 = smul.addr %s31, 48
          %s361 = smul.addr %s360, 4
          %s362 = scalar_lea.hbm %s5, %s361
          %s363 = sshll.u32 %s362, 4
          %s364 = int_to_ptr.hbm [resolvable:$true] %s363
          %s365 = sshll.u32 %s357, 4
          %s366 = int_to_ptr.vmem [resolvable:$true] %s365
          %371 = dma.hbm_to_vmem [thread:$0]  %s364, 3072, %s366, %s354, 64, 64, 4
        $region40: #{tpu_custom_call.1} parent=15 // pred_fallthru
          _
        // Predicated region
        $region41: #{tpu_custom_call.1} parent=15 // pred_check
          %p372 = pneg %p211
        $region42: #{tpu_custom_call.1} parent=15 // pred_check_branch
          %374 = sbr.rel (%p372) target = $region44
        $region43: #{tpu_custom_call.1} parent=15 // pred_region
          %p375 = scmp.lt.s32.totalorder %s31, 1
          %s376 = scalar_select %p375, %s31, 1
          %s377 = smul.addr %s376, 16
          %s378 = smul.addr %s377, 4
          %s379 = scalar_lea.vmem %s6, %s378
        $region44: #{tpu_custom_call.1} parent=15 // pred_fallthru
          _
        // Predicated region
        $region45: #{tpu_custom_call.1} parent=15 // pred_check
          %p380 = pneg %p237
        $region46: #{tpu_custom_call.1} parent=15 // pred_check_branch
          %382 = sbr.rel (%p380) target = $region48
        $region47: #{tpu_custom_call.1} parent=15 // pred_region
          %p383 = scmp.lt.s32.totalorder %s31, 1
          %s384 = scalar_select %p383, %s31, 1
          %s385 = smul.addr %s384, 6
          %s386 = smul.addr %s385, 8
          %s387 = scalar_lea.vmem %s7, %s386
        $region48: #{tpu_custom_call.1} parent=15 // pred_fallthru
          _
      $region16: #{tpu_custom_call.1} parent=5 // pred_fallthru
        _
      %p388 = scmp.le.s32.totalorder 1, %s23
      %p389 = scmp.lt.s32.totalorder %s23, 5
      %p390 = pnand %p388, %p389
      %p391 = pneg %p390
      // Predicated region
      $region49: #{tpu_custom_call.1} parent=5 // pred_check
        _
      $region50: #{tpu_custom_call.1} parent=5 // pred_check_branch
        %393 = sbr.rel (%p390) target = $region52
      $region51: #{tpu_custom_call.1} parent=5 // pred_region
        %s394 = ssub.s32 %s23, 1
        %s395 = sand.u32 %s126, 1
        %s396 = scalar_lea.sflag [#allocation4], %s395
        %s397 = sand.u32 %s126, 1
        %s398 = smul.addr %s397, 8
        %s399 = scalar_lea.vmem [#allocation3], %s398
        // Predicated region
        $region53: #{tpu_custom_call.1} parent=51 // pred_check
          %p400 = pneg %p139
        $region54: #{tpu_custom_call.1} parent=51 // pred_check_branch
          %402 = sbr.rel (%p400) target = $region56
        $region55: #{tpu_custom_call.1} parent=51 // pred_region
          %404 = dma.done %s396, 128
        $region56: #{tpu_custom_call.1} parent=51 // pred_fallthru
          _
        %s405 = sand.u32 %s28, 1
        %s406 = scalar_lea.sflag [#allocation7], %s405
        %s407 = sand.u32 %s152, 1
        %s408 = smul.addr %s407, 384
        %s409 = scalar_lea.vmem [#allocation6], %s408
        // Predicated region
        $region57: #{tpu_custom_call.1} parent=51 // pred_check
          %p410 = pneg %p165
        $region58: #{tpu_custom_call.1} parent=51 // pred_check_branch
          %412 = sbr.rel (%p410) target = $region60
        $region59: #{tpu_custom_call.1} parent=51 // pred_region
          %414 = dma.done %s406, 6144
        $region60: #{tpu_custom_call.1} parent=51 // pred_fallthru
          _
        %s415 = sand.u32 %s28, 1
        %s416 = scalar_lea.sflag [#allocation7], %s415
        %s417 = sand.u32 %s178, 1
        %s418 = smul.addr %s417, 192
        %s419 = scalar_lea.vmem [#allocation8], %s418
        // Predicated region
        $region61: #{tpu_custom_call.1} parent=51 // pred_check
          %p420 = pneg %p191
        $region62: #{tpu_custom_call.1} parent=51 // pred_check_branch
          %422 = sbr.rel (%p420) target = $region64
        $region63: #{tpu_custom_call.1} parent=51 // pred_region
          %424 = dma.done %s416, 3072
        $region64: #{tpu_custom_call.1} parent=51 // pred_fallthru
          _
        %p425 = scmp.lt.s32.totalorder %s32, 1
        %s426 = scalar_select %p425, %s32, 1
        %s427 = smul.addr %s426, 8
        %s428 = scalar_lea.vmem %s0, %s427
        %p429 = pneg %p61
        %p430 = pneg %p58
        %p431 = scmp.lt.s32.totalorder %s32, 1
        %s432 = scalar_select %p431, %s32, 1
        %s433 = smul.addr %s432, 4
        %s434 = scalar_lea.vmem %s1, %s433
        %p435 = pneg %p87
        %p436 = pneg %p84
        %p437 = scmp.lt.s32.totalorder %s32, 1
        %s438 = scalar_select %p437, %s32, 1
        %s439 = smul.addr %s438, 8
        %s440 = scalar_lea.vmem %s2, %s439
        %p441 = pneg %p113
        %p442 = pneg %p110
        %s443 = sand.u32 %s126, 1
        %s444 = scalar_lea.sflag [#allocation4], %s443
        %s445 = sand.u32 %s126, 1
        %s446 = smul.addr %s445, 8
        %s447 = scalar_lea.vmem [#allocation3], %s446
        %p448 = pneg %p139
        %p449 = pneg %p136
        %s450 = sand.u32 %s28, 1
        %s451 = scalar_lea.sflag [#allocation7], %s450
        %s452 = sand.u32 %s152, 1
        %s453 = smul.addr %s452, 384
        %s454 = scalar_lea.vmem [#allocation6], %s453
        %p455 = pneg %p165
        %p456 = pneg %p162
        %s457 = sand.u32 %s28, 1
        %s458 = scalar_lea.sflag [#allocation7], %s457
        %s459 = sand.u32 %s178, 1
        %s460 = smul.addr %s459, 192
        %s461 = scalar_lea.vmem [#allocation8], %s460
        %p462 = pneg %p191
        %p463 = pneg %p188
        %p464 = scmp.lt.s32.totalorder %s33, 1
        %s465 = scalar_select %p464, %s33, 1
        %s466 = smul.addr %s465, 16
        %s467 = smul.addr %s466, 4
        %s468 = scalar_lea.vmem %s6, %s467
        %p469 = pneg %p217
        %p470 = pneg %p214
        %p471 = scmp.lt.s32.totalorder %s33, 1
        %s472 = scalar_select %p471, %s33, 1
        %s473 = smul.addr %s472, 6
        %s474 = smul.addr %s473, 8
        %s475 = scalar_lea.vmem %s7, %s474
        %p476 = pneg %p243
        %p477 = pneg %p240
        %p478 = pneg %p269
        %p479 = pneg %p266
        %s480 = sand.u32 %s256, 1
        %s481 = scalar_lea.sflag [#allocation5], %s480
        %s482 = sand.u32 %s256, 1
        %s483 = smul.addr %s482, 8
        %s484 = scalar_lea.vmem [#allocation9], %s483
        %p485 = scmp.lt.s32.totalorder %s32, 1
        %s486 = scalar_select %p485, %s32, 1
        %s487 = smul.addr %s486, 8
        %s488 = scalar_lea.vmem %s0, %s487
        %p489 = scmp.lt.s32.totalorder %s32, 1
        %s490 = scalar_select %p489, %s32, 1
        %s491 = smul.addr %s490, 4
        %s492 = scalar_lea.vmem %s1, %s491
        %p493 = scmp.lt.s32.totalorder %s32, 1
        %s494 = scalar_select %p493, %s32, 1
        %s495 = smul.addr %s494, 8
        %s496 = scalar_lea.vmem %s2, %s495
        %p497 = scmp.lt.s32.totalorder %s33, 1
        %s498 = scalar_select %p497, %s33, 1
        %s499 = smul.addr %s498, 16
        %s500 = smul.addr %s499, 4
        %s501 = scalar_lea.vmem %s6, %s500
        %p502 = scmp.lt.s32.totalorder %s33, 1
        %s503 = scalar_select %p502, %s33, 1
        %s504 = smul.addr %s503, 6
        %s505 = smul.addr %s504, 8
        %s506 = scalar_lea.vmem %s7, %s505
        %p508 = scmp.eq.s32.totalorder %s33, 0
        // Predicated region
        $region65: #{tpu_custom_call.1} parent=51 // pred_check
          %p509 = pneg %p508
        $region66: #{tpu_custom_call.1} parent=51 // pred_check_branch
          %511 = sbr.rel (%p509) target = $region68
        $region67: #{tpu_custom_call.1} parent=51 // pred_region
          %v512 = vld [vmem:[%s488] sm:$0xff]
          %513 = vst [vmem:[#allocation2] sm:$0xff] %v512
        $region68: #{tpu_custom_call.1} parent=51 // pred_fallthru
          _
        %v514 = vld [vmem:[#allocation2] sm:$0xff]
        %v515 = vld [vmem:[%s506] sm:$0xff]
        %v516 = vld [vmem:[%s506 + $0x8] sm:$0xff]
        %v517 = vld [vmem:[%s506 + $0x10] sm:$0xff]
        %v518 = vld [vmem:[%s506 + $0x18] sm:$0xf]
        %v519 = vld [vmem:[%s492] sm:$0xf]
        %v520 = vld [vmem:[%s496] sm:$0xff]
        %v521 = vld [vmem:[%s399] sm:$0xff]
        %522 = vadd.xlane.f32.xlu0 %v514
        %v523 = vpop.xlane.xlu0 %522
        %v524 = vmul.f32 %v523, 0.03125
        %v525 = vmul.f32 %v514, %v514
        %526 = vadd.xlane.f32.xlu0 %v525
        %v527 = vpop.xlane.xlu0 %526
        %v528 = vmul.f32 %v527, 0.03125
        %v529 = vmul.f32 %v524, %v524
        %v530 = vsub.f32 %v528, %v529
        %v531 = vmax.f32 %v530, 0.0
        %v532 = vsub.f32 %v514, %v524
        %v533 = vadd.f32 %v531, 1e-05
        %v534 = vrsqrt.pop %v533
        %v535 = vmul.f32 %v534, %v533
        %v536 = vmul.f32 %v535, %v534
        %v537 = vmul.f32 0.5, %v536
        %v538 = vsub.f32 1.5, %v537
        %v539 = vmul.f32 %v534, %v538
        %vm540 = vweird.f32 %v533
        %vm541 = vweird.f32 %v534
        %vm542 = vmor %vm540, %vm541
        %v543 = vsel %vm542, %v534, %v539
        %v544 = vmul.f32 %v532, %v543
        %v545 = vperm.slane %v515, 6
        %v546 = vmul.f32 %v544, %v545
        %v547 = vperm.slane %v515, 7
        %v548 = vadd.f32 %v546, %v547
        %v549 = vpack.c.bf16 %v548, %v548
        %v550 = vld [vmem:[%s409] sm:$0xff]
        %v551 = vld [vmem:[%s409 + $0x8] sm:$0xf]
        %v552 = vld [vmem:[%s409 + $0xc] sm:$0xff]
        %v553 = vld [vmem:[%s409 + $0x14] sm:$0xf]
        %v554 = vld [vmem:[%s409 + $0x18] sm:$0xff]
        %v555 = vld [vmem:[%s409 + $0x20] sm:$0xf]
        %v556 = vld [vmem:[%s409 + $0x24] sm:$0xff]
        %v557 = vld [vmem:[%s409 + $0x2c] sm:$0xf]
        %v558 = vld [vmem:[%s409 + $0x30] sm:$0xff]
        %v559 = vld [vmem:[%s409 + $0x38] sm:$0xf]
        %v560 = vld [vmem:[%s409 + $0x3c] sm:$0xff]
        %v561 = vld [vmem:[%s409 + $0x44] sm:$0xf]
        %v562 = vld [vmem:[%s409 + $0x48] sm:$0xff]
        %v563 = vld [vmem:[%s409 + $0x50] sm:$0xf]
        %v564 = vld [vmem:[%s409 + $0x54] sm:$0xff]
        %v565 = vld [vmem:[%s409 + $0x5c] sm:$0xf]
        %v566 = vld [vmem:[%s409 + $0x60] sm:$0xff]
        %v567 = vld [vmem:[%s409 + $0x68] sm:$0xf]
        %v568 = vld [vmem:[%s409 + $0x6c] sm:$0xff]
        %v569 = vld [vmem:[%s409 + $0x74] sm:$0xf]
        %v570 = vld [vmem:[%s409 + $0x78] sm:$0xff]
        %v571 = vld [vmem:[%s409 + $0x80] sm:$0xf]
        %v572 = vld [vmem:[%s409 + $0x84] sm:$0xff]
        %v573 = vld [vmem:[%s409 + $0x8c] sm:$0xf]
        %v574 = vld [vmem:[%s409 + $0x90] sm:$0xff]
        %v575 = vld [vmem:[%s409 + $0x98] sm:$0xf]
        %v576 = vld [vmem:[%s409 + $0x9c] sm:$0xff]
        %v577 = vld [vmem:[%s409 + $0xa4] sm:$0xf]
        %v578 = vld [vmem:[%s409 + $0xa8] sm:$0xff]
        %v579 = vld [vmem:[%s409 + $0xb0] sm:$0xf]
        %v580 = vld [vmem:[%s409 + $0xb4] sm:$0xff]
        %v581 = vld [vmem:[%s409 + $0xbc] sm:$0xf]
        %v582 = vperm.slane %v515, 0
        %v583 = vperm.slane %v516, 0
        %v584 = vperm.slane %v517, 0
        %v617 = vunpack.c.l.b16 %v550
        %v618 = vunpack.c.h.b16 %v550
        %v619 = vunpack.c.l.b16 %v551
        %v620 = vunpack.c.l.b16 %v552
        %v621 = vunpack.c.h.b16 %v552
        %v622 = vunpack.c.l.b16 %v553
        %v623 = vunpack.c.l.b16 %v554
        %v624 = vunpack.c.h.b16 %v554
        %v625 = vunpack.c.l.b16 %v555
        %v626 = vunpack.c.l.b16 %v556
        %v627 = vunpack.c.h.b16 %v556
        %v628 = vunpack.c.l.b16 %v557
        %v629 = vunpack.c.l.b16 %v558
        %v630 = vunpack.c.h.b16 %v558
        %v631 = vunpack.c.l.b16 %v559
        %v632 = vunpack.c.l.b16 %v560
        %v633 = vunpack.c.h.b16 %v560
        %v634 = vunpack.c.l.b16 %v561
        %v635 = vunpack.c.l.b16 %v562
        %v636 = vunpack.c.h.b16 %v562
        %v637 = vunpack.c.l.b16 %v563
        %v638 = vunpack.c.l.b16 %v564
        %v639 = vunpack.c.h.b16 %v564
        %v640 = vunpack.c.l.b16 %v565
        %v641 = vunpack.c.l.b16 %v566
        %v642 = vunpack.c.h.b16 %v566
        %v643 = vunpack.c.l.b16 %v567
        %v644 = vunpack.c.l.b16 %v568
        %v645 = vunpack.c.h.b16 %v568
        %v646 = vunpack.c.l.b16 %v569
        %v647 = vunpack.c.l.b16 %v570
        %v648 = vunpack.c.h.b16 %v570
        %v649 = vunpack.c.l.b16 %v571
        %v650 = vunpack.c.l.b16 %v572
        %v651 = vunpack.c.h.b16 %v572
        %v652 = vunpack.c.l.b16 %v573
        %v653 = vunpack.c.l.b16 %v574
        %v654 = vunpack.c.h.b16 %v574
        %v655 = vunpack.c.l.b16 %v575
        %v656 = vunpack.c.l.b16 %v576
        %v657 = vunpack.c.h.b16 %v576
        %v658 = vunpack.c.l.b16 %v577
        %v659 = vunpack.c.l.b16 %v578
        %v660 = vunpack.c.h.b16 %v578
        %v661 = vunpack.c.l.b16 %v579
        %v662 = vunpack.c.l.b16 %v580
        %v663 = vunpack.c.h.b16 %v580
        %v664 = vunpack.c.l.b16 %v581
        %v665 = vpack.c.b16 %v620, %v617
        %v666 = vpack.c.b16 %v621, %v618
        %v667 = vpack.c.b16 %v622, %v619
        %v668 = vpack.c.b16 %v626, %v623
        %v669 = vpack.c.b16 %v627, %v624
        %v670 = vpack.c.b16 %v628, %v625
        %v671 = vpack.c.b16 %v632, %v629
        %v672 = vpack.c.b16 %v633, %v630
        %v673 = vpack.c.b16 %v634, %v631
        %v674 = vpack.c.b16 %v638, %v635
        %v675 = vpack.c.b16 %v639, %v636
        %v676 = vpack.c.b16 %v640, %v637
        %v677 = vpack.c.b16 %v644, %v641
        %v678 = vpack.c.b16 %v645, %v642
        %v679 = vpack.c.b16 %v646, %v643
        %v680 = vpack.c.b16 %v650, %v647
        %v681 = vpack.c.b16 %v651, %v648
        %v682 = vpack.c.b16 %v652, %v649
        %v683 = vpack.c.b16 %v656, %v653
        %v684 = vpack.c.b16 %v657, %v654
        %v685 = vpack.c.b16 %v658, %v655
        %v686 = vpack.c.b16 %v662, %v659
        %v687 = vpack.c.b16 %v663, %v660
        %v688 = vpack.c.b16 %v664, %v661
        %713 = vmatpush.bf16.msra.mxu0 %v686
        %714 = vmatpush.bf16.msra.mxu0 %v683
        %715 = vmatpush.bf16.msra.mxu0 %v680
        %716 = vmatpush.bf16.msra.mxu0 %v677
        %717 = vmatpush.bf16.msra.mxu0 %v674
        %718 = vmatpush.bf16.msra.mxu0 %v671
        %719 = vmatpush.bf16.msra.mxu0 %v668
        %720 = vmatpush.bf16.msra.mxu0 %v665
        %721 = vmatmul.bf16.gmra.mxu0 %v549
        %v722 = vpop.f32.mrf.mxu0
        %v723 = vadd.f32 %v582, %v722
        %v724 = vpop.f32.mrf.mxu0
        %725 = vdwg.mxu0
        %726 = vmatpush.bf16.msra.mxu0 %v687
        %727 = vmatpush.bf16.msra.mxu0 %v684
        %728 = vmatpush.bf16.msra.mxu0 %v681
        %729 = vmatpush.bf16.msra.mxu0 %v678
        %730 = vmatpush.bf16.msra.mxu0 %v675
        %731 = vmatpush.bf16.msra.mxu0 %v672
        %732 = vmatpush.bf16.msra.mxu0 %v669
        %733 = vmatpush.bf16.msra.mxu0 %v666
        %734 = vmatmul.bf16.gmra.mxu0 %v549
        %v735 = vpop.f32.mrf.mxu0
        %v736 = vadd.f32 %v583, %v735
        %v737 = vpop.f32.mrf.mxu0
        %738 = vdwg.mxu0
        %739 = vmatpush.bf16.msra.mxu0 %v688
        %740 = vmatpush.bf16.msra.mxu0 %v685
        %741 = vmatpush.bf16.msra.mxu0 %v682
        %742 = vmatpush.bf16.msra.mxu0 %v679
        %743 = vmatpush.bf16.msra.mxu0 %v676
        %744 = vmatpush.bf16.msra.mxu0 %v673
        %745 = vmatpush.bf16.msra.mxu0 %v670
        %746 = vmatpush.bf16.msra.mxu0 %v667
        %747 = vmatmul.bf16.gmra.mxu0 %v549
        %v748 = vpop.f32.mrf.mxu0
        %v749 = vadd.f32 %v584, %v748
        %v750 = vpop.f32.mrf.mxu0
        %751 = vdwg.mxu0
        %v752 = vpack.c.bf16 %v723, %v723
        %v753 = vpack.c.bf16 %v736, %v736
        %v754 = vpack.c.bf16 %v749, %v749
        %vm755 = vcmask 261120
        %v757 = vsel %vm755, %v752, 0
        %v760 = vsel %vm755, %v753, 0
        %762 = vmatpush.bf16.xpose.msra.mxu0 0
        %763 = vmatpush.bf16.xpose.msra.mxu0 0
        %764 = vmatpush.bf16.xpose.msra.mxu0 0
        %765 = vmatpush.bf16.xpose.msra.mxu0 0
        %766 = vmatpush.bf16.xpose.msra.mxu0 0
        %767 = vmatpush.bf16.xpose.msra.mxu0 0
        %768 = vmatpush.bf16.xpose.msra.mxu0 0
        %769 = vmatpush.bf16.xpose.msra.mxu0 %v760
        %770 = vmatmul.bf16.gmra.mxu0 %v757
        %v771 = vpop.f32.mrf.mxu0
        %v772 = vadd.f32 %v520, %v771
        %v773 = vpop.f32.mrf.mxu0
        %774 = vdwg.mxu0
        %vm775 = vcmask 64512
        %v776 = vsel %vm775, %v772, -inf
        %777 = vmax.xlane.f32.xlu0 %v776
        %v778 = vpop.xlane.xlu0 %777
        %v779 = vsub.f32 %v772, %v778
        %v780 = vmul.f32 %v779, 1.442695
        %v781 = vpow.pop %v780
        %v782 = vsel %vm775, %v781, 0.0
        %783 = vadd.xlane.f32.xlu0 %v782
        %v784 = vpop.xlane.xlu0 %783
        %v785 = vrcp.pop %v784
        %v786 = vmul.f32 %v781, %v785
        %v787 = vpack.c.bf16 %v786, %v786
        %v789 = vsel %vm775, %v787, 0
        %vm791 = vcmask 1043456
        %v793 = vsel %vm791, %v754, 0
        %795 = vmatpush.bf16.msra.mxu0 0
        %796 = vmatpush.bf16.msra.mxu0 0
        %797 = vmatpush.bf16.msra.mxu0 0
        %798 = vmatpush.bf16.msra.mxu0 0
        %799 = vmatpush.bf16.msra.mxu0 0
        %800 = vmatpush.bf16.msra.mxu0 0
        %801 = vmatpush.bf16.msra.mxu0 0
        %802 = vmatpush.bf16.msra.mxu0 %v793
        %803 = vmatmul.bf16.gmra.mxu0 %v789
        %v804 = vpop.f32.mrf.mxu0
        %v805 = vadd.f32 0.0, %v804
        %v806 = vpop.f32.mrf.mxu0
        %807 = vdwg.mxu0
        %v809 = vunpack.c.l.b16 %v752
        %v810 = vpack.c.b16 %v809, %v809
        %811 = vrot.lane.b32.xlu0 %v810, 96
        %v812 = vpop.permute.xlu0 %811
        %v814 = vunpack.c.l.b16 %v753
        %v815 = vpack.c.b16 %v814, %v814
        %816 = vrot.lane.b32.xlu0 %v815, 96
        %v817 = vpop.permute.xlu0 %816
        %v819 = vsel %vm755, %v812, 0
        %v822 = vsel %vm755, %v817, 0
        %824 = vmatpush.bf16.xpose.msra.mxu0 0
        %825 = vmatpush.bf16.xpose.msra.mxu0 0
        %826 = vmatpush.bf16.xpose.msra.mxu0 0
        %827 = vmatpush.bf16.xpose.msra.mxu0 0
        %828 = vmatpush.bf16.xpose.msra.mxu0 0
        %829 = vmatpush.bf16.xpose.msra.mxu0 0
        %830 = vmatpush.bf16.xpose.msra.mxu0 0
        %831 = vmatpush.bf16.xpose.msra.mxu0 %v822
        %832 = vmatmul.bf16.gmra.mxu0 %v819
        %v833 = vpop.f32.mrf.mxu0
        %v834 = vadd.f32 %v520, %v833
        %v835 = vpop.f32.mrf.mxu0
        %836 = vdwg.mxu0
        %v837 = vsel %vm775, %v834, -inf
        %838 = vmax.xlane.f32.xlu0 %v837
        %v839 = vpop.xlane.xlu0 %838
        %v840 = vsub.f32 %v834, %v839
        %v841 = vmul.f32 %v840, 1.442695
        %v842 = vpow.pop %v841
        %v843 = vsel %vm775, %v842, 0.0
        %844 = vadd.xlane.f32.xlu0 %v843
        %v845 = vpop.xlane.xlu0 %844
        %v846 = vrcp.pop %v845
        %v847 = vmul.f32 %v842, %v846
        %v848 = vpack.c.bf16 %v847, %v847
        %v850 = vunpack.c.l.b16 %v754
        %v851 = vpack.c.b16 %v850, %v850
        %852 = vrot.lane.b32.xlu0 %v851, 96
        %v853 = vpop.permute.xlu0 %852
        %v855 = vsel %vm775, %v848, 0
        %v858 = vsel %vm791, %v853, 0
        %860 = vmatpush.bf16.msra.mxu0 0
        %861 = vmatpush.bf16.msra.mxu0 0
        %862 = vmatpush.bf16.msra.mxu0 0
        %863 = vmatpush.bf16.msra.mxu0 0
        %864 = vmatpush.bf16.msra.mxu0 0
        %865 = vmatpush.bf16.msra.mxu0 0
        %866 = vmatpush.bf16.msra.mxu0 0
        %867 = vmatpush.bf16.msra.mxu0 %v858
        %868 = vmatmul.bf16.gmra.mxu0 %v855
        %v869 = vpop.f32.mrf.mxu0
        %v870 = vadd.f32 0.0, %v869
        %v871 = vpop.f32.mrf.mxu0
        %872 = vdwg.mxu0
        %873 = vrot.lane.b32.xlu0 %v810, 64
        %v874 = vpop.permute.xlu0 %873
        %875 = vrot.lane.b32.xlu0 %v815, 64
        %v876 = vpop.permute.xlu0 %875
        %v878 = vsel %vm755, %v874, 0
        %v881 = vsel %vm755, %v876, 0
        %883 = vmatpush.bf16.xpose.msra.mxu0 0
        %884 = vmatpush.bf16.xpose.msra.mxu0 0
        %885 = vmatpush.bf16.xpose.msra.mxu0 0
        %886 = vmatpush.bf16.xpose.msra.mxu0 0
        %887 = vmatpush.bf16.xpose.msra.mxu0 0
        %888 = vmatpush.bf16.xpose.msra.mxu0 0
        %889 = vmatpush.bf16.xpose.msra.mxu0 0
        %890 = vmatpush.bf16.xpose.msra.mxu0 %v881
        %891 = vmatmul.bf16.gmra.mxu0 %v878
        %v892 = vpop.f32.mrf.mxu0
        %v893 = vadd.f32 %v520, %v892
        %v894 = vpop.f32.mrf.mxu0
        %895 = vdwg.mxu0
        %v896 = vsel %vm775, %v893, -inf
        %897 = vmax.xlane.f32.xlu0 %v896
        %v898 = vpop.xlane.xlu0 %897
        %v899 = vsub.f32 %v893, %v898
        %v900 = vmul.f32 %v899, 1.442695
        %v901 = vpow.pop %v900
        %v902 = vsel %vm775, %v901, 0.0
        %903 = vadd.xlane.f32.xlu0 %v902
        %v904 = vpop.xlane.xlu0 %903
        %v905 = vrcp.pop %v904
        %v906 = vmul.f32 %v901, %v905
        %v907 = vpack.c.bf16 %v906, %v906
        %908 = vrot.lane.b32.xlu0 %v851, 64
        %v909 = vpop.permute.xlu0 %908
        %v911 = vsel %vm775, %v907, 0
        %v914 = vsel %vm791, %v909, 0
        %916 = vmatpush.bf16.msra.mxu0 0
        %917 = vmatpush.bf16.msra.mxu0 0
        %918 = vmatpush.bf16.msra.mxu0 0
        %919 = vmatpush.bf16.msra.mxu0 0
        %920 = vmatpush.bf16.msra.mxu0 0
        %921 = vmatpush.bf16.msra.mxu0 0
        %922 = vmatpush.bf16.msra.mxu0 0
        %923 = vmatpush.bf16.msra.mxu0 %v914
        %924 = vmatmul.bf16.gmra.mxu0 %v911
        %v925 = vpop.f32.mrf.mxu0
        %v926 = vadd.f32 0.0, %v925
        %v927 = vpop.f32.mrf.mxu0
        %928 = vdwg.mxu0
        %929 = vrot.lane.b32.xlu0 %v810, 32
        %v930 = vpop.permute.xlu0 %929
        %931 = vrot.lane.b32.xlu0 %v815, 32
        %v932 = vpop.permute.xlu0 %931
        %v934 = vsel %vm755, %v930, 0
        %v937 = vsel %vm755, %v932, 0
        %939 = vmatpush.bf16.xpose.msra.mxu0 0
        %940 = vmatpush.bf16.xpose.msra.mxu0 0
        %941 = vmatpush.bf16.xpose.msra.mxu0 0
        %942 = vmatpush.bf16.xpose.msra.mxu0 0
        %943 = vmatpush.bf16.xpose.msra.mxu0 0
        %944 = vmatpush.bf16.xpose.msra.mxu0 0
        %945 = vmatpush.bf16.xpose.msra.mxu0 0
        %946 = vmatpush.bf16.xpose.msra.mxu0 %v937
        %947 = vmatmul.bf16.gmra.mxu0 %v934
        %v948 = vpop.f32.mrf.mxu0
        %v949 = vadd.f32 %v520, %v948
        %v950 = vpop.f32.mrf.mxu0
        %951 = vdwg.mxu0
        %v952 = vsel %vm775, %v949, -inf
        %953 = vmax.xlane.f32.xlu0 %v952
        %v954 = vpop.xlane.xlu0 %953
        %v955 = vsub.f32 %v949, %v954
        %v956 = vmul.f32 %v955, 1.442695
        %v957 = vpow.pop %v956
        %v958 = vsel %vm775, %v957, 0.0
        %959 = vadd.xlane.f32.xlu0 %v958
        %v960 = vpop.xlane.xlu0 %959
        %v961 = vrcp.pop %v960
        %v962 = vmul.f32 %v957, %v961
        %v963 = vpack.c.bf16 %v962, %v962
        %964 = vrot.lane.b32.xlu0 %v851, 32
        %v965 = vpop.permute.xlu0 %964
        %v967 = vsel %vm775, %v963, 0
        %v970 = vsel %vm791, %v965, 0
        %972 = vmatpush.bf16.msra.mxu0 0
        %973 = vmatpush.bf16.msra.mxu0 0
        %974 = vmatpush.bf16.msra.mxu0 0
        %975 = vmatpush.bf16.msra.mxu0 0
        %976 = vmatpush.bf16.msra.mxu0 0
        %977 = vmatpush.bf16.msra.mxu0 0
        %978 = vmatpush.bf16.msra.mxu0 0
        %979 = vmatpush.bf16.msra.mxu0 %v970
        %980 = vmatmul.bf16.gmra.mxu0 %v967
        %v981 = vpop.f32.mrf.mxu0
        %v982 = vadd.f32 0.0, %v981
        %v983 = vpop.f32.mrf.mxu0
        %984 = vdwg.mxu0
        %986 = vrot.lane.b32.xlu0 %v870, 32
        %v987 = vpop.permute.xlu0 %986
        %990 = vrot.lane.b32.xlu0 %v926, 64
        %v991 = vpop.permute.xlu0 %990
        %994 = vrot.lane.b32.xlu0 %v982, 96
        %v995 = vpop.permute.xlu0 %994
        %v997 = vsel %vm755, %v805, %v987
        %vm998 = vcmask 523264
        %v999 = vsel %vm998, %v997, %v991
        %vm1000 = vcmask 785408
        %v1001 = vsel %vm1000, %v999, %v995
        %v1002 = vpack.c.bf16 %v1001, %v1001
        %v1003 = vld [vmem:[%s419] sm:$0xf]
        %v1004 = vld [vmem:[%s419 + $0x4] sm:$0xf]
        %v1005 = vld [vmem:[%s419 + $0x8] sm:$0xf]
        %v1006 = vld [vmem:[%s419 + $0xc] sm:$0xf]
        %v1007 = vld [vmem:[%s419 + $0x10] sm:$0xf]
        %v1008 = vld [vmem:[%s419 + $0x14] sm:$0xf]
        %v1009 = vld [vmem:[%s419 + $0x18] sm:$0xf]
        %v1010 = vld [vmem:[%s419 + $0x1c] sm:$0xf]
        %v1011 = vld [vmem:[%s419 + $0x20] sm:$0xf]
        %v1012 = vld [vmem:[%s419 + $0x24] sm:$0xf]
        %v1013 = vld [vmem:[%s419 + $0x28] sm:$0xf]
        %v1014 = vld [vmem:[%s419 + $0x2c] sm:$0xf]
        %v1015 = vld [vmem:[%s419 + $0x30] sm:$0xf]
        %v1016 = vld [vmem:[%s419 + $0x34] sm:$0xf]
        %v1017 = vld [vmem:[%s419 + $0x38] sm:$0xf]
        %v1018 = vld [vmem:[%s419 + $0x3c] sm:$0xf]
        %v1019 = vperm.slane %v515, 1
        %v1036 = vunpack.c.l.b16 %v1003
        %v1037 = vunpack.c.l.b16 %v1004
        %v1038 = vunpack.c.l.b16 %v1005
        %v1039 = vunpack.c.l.b16 %v1006
        %v1040 = vunpack.c.l.b16 %v1007
        %v1041 = vunpack.c.l.b16 %v1008
        %v1042 = vunpack.c.l.b16 %v1009
        %v1043 = vunpack.c.l.b16 %v1010
        %v1044 = vunpack.c.l.b16 %v1011
        %v1045 = vunpack.c.l.b16 %v1012
        %v1046 = vunpack.c.l.b16 %v1013
        %v1047 = vunpack.c.l.b16 %v1014
        %v1048 = vunpack.c.l.b16 %v1015
        %v1049 = vunpack.c.l.b16 %v1016
        %v1050 = vunpack.c.l.b16 %v1017
        %v1051 = vunpack.c.l.b16 %v1018
        %v1052 = vpack.c.b16 %v1037, %v1036
        %v1053 = vpack.c.b16 %v1039, %v1038
        %v1054 = vpack.c.b16 %v1041, %v1040
        %v1055 = vpack.c.b16 %v1043, %v1042
        %v1056 = vpack.c.b16 %v1045, %v1044
        %v1057 = vpack.c.b16 %v1047, %v1046
        %v1058 = vpack.c.b16 %v1049, %v1048
        %v1059 = vpack.c.b16 %v1051, %v1050
        %1068 = vmatpush.bf16.msra.mxu0 %v1059
        %1069 = vmatpush.bf16.msra.mxu0 %v1058
        %1070 = vmatpush.bf16.msra.mxu0 %v1057
        %1071 = vmatpush.bf16.msra.mxu0 %v1056
        %1072 = vmatpush.bf16.msra.mxu0 %v1055
        %1073 = vmatpush.bf16.msra.mxu0 %v1054
        %1074 = vmatpush.bf16.msra.mxu0 %v1053
        %1075 = vmatpush.bf16.msra.mxu0 %v1052
        %1076 = vmatmul.bf16.gmra.mxu0 %v1002
        %v1077 = vpop.f32.mrf.mxu0
        %v1078 = vadd.f32 %v1019, %v1077
        %v1079 = vpop.f32.mrf.mxu0
        %1080 = vdwg.mxu0
        %v1081 = vadd.f32 %v514, %v1078
        %1082 = vadd.xlane.f32.xlu0 %v1081
        %v1083 = vpop.xlane.xlu0 %1082
        %v1084 = vmul.f32 %v1083, 0.03125
        %v1085 = vmul.f32 %v1081, %v1081
        %1086 = vadd.xlane.f32.xlu0 %v1085
        %v1087 = vpop.xlane.xlu0 %1086
        %v1088 = vmul.f32 %v1087, 0.03125
        %v1089 = vmul.f32 %v1084, %v1084
        %v1090 = vsub.f32 %v1088, %v1089
        %v1091 = vmax.f32 %v1090, 0.0
        %v1092 = vsub.f32 %v1081, %v1084
        %v1093 = vadd.f32 %v1091, 1e-05
        %v1094 = vrsqrt.pop %v1093
        %v1095 = vmul.f32 %v1094, %v1093
        %v1096 = vmul.f32 %v1095, %v1094
        %v1097 = vmul.f32 0.5, %v1096
        %v1098 = vsub.f32 1.5, %v1097
        %v1099 = vmul.f32 %v1094, %v1098
        %vm1100 = vweird.f32 %v1093
        %vm1101 = vweird.f32 %v1094
        %vm1102 = vmor %vm1100, %vm1101
        %v1103 = vsel %vm1102, %v1094, %v1099
        %v1104 = vmul.f32 %v1092, %v1103
        %v1105 = vperm.slane %v518, 0
        %v1106 = vmul.f32 %v1104, %v1105
        %v1107 = vperm.slane %v518, 1
        %v1108 = vadd.f32 %v1106, %v1107
        %v1109 = vpack.c.bf16 %v1108, %v1108
        %v1110 = vld [vmem:[%s409 + $0xc0] sm:$0xf]
        %v1111 = vld [vmem:[%s409 + $0xcc] sm:$0xf]
        %v1112 = vld [vmem:[%s409 + $0xd8] sm:$0xf]
        %v1113 = vld [vmem:[%s409 + $0xe4] sm:$0xf]
        %v1114 = vld [vmem:[%s409 + $0xf0] sm:$0xf]
        %v1115 = vld [vmem:[%s409 + $0xfc] sm:$0xf]
        %v1116 = vld [vmem:[%s409 + $0x108] sm:$0xf]
        %v1117 = vld [vmem:[%s409 + $0x114] sm:$0xf]
        %v1118 = vld [vmem:[%s409 + $0x120] sm:$0xf]
        %v1119 = vld [vmem:[%s409 + $0x12c] sm:$0xf]
        %v1120 = vld [vmem:[%s409 + $0x138] sm:$0xf]
        %v1121 = vld [vmem:[%s409 + $0x144] sm:$0xf]
        %v1122 = vld [vmem:[%s409 + $0x150] sm:$0xf]
        %v1123 = vld [vmem:[%s409 + $0x15c] sm:$0xf]
        %v1124 = vld [vmem:[%s409 + $0x168] sm:$0xf]
        %v1125 = vld [vmem:[%s409 + $0x174] sm:$0xf]
        %v1126 = vperm.slane %v515, 2
        %v1143 = vunpack.c.l.b16 %v1110
        %v1144 = vunpack.c.l.b16 %v1111
        %v1145 = vunpack.c.l.b16 %v1112
        %v1146 = vunpack.c.l.b16 %v1113
        %v1147 = vunpack.c.l.b16 %v1114
        %v1148 = vunpack.c.l.b16 %v1115
        %v1149 = vunpack.c.l.b16 %v1116
        %v1150 = vunpack.c.l.b16 %v1117
        %v1151 = vunpack.c.l.b16 %v1118
        %v1152 = vunpack.c.l.b16 %v1119
        %v1153 = vunpack.c.l.b16 %v1120
        %v1154 = vunpack.c.l.b16 %v1121
        %v1155 = vunpack.c.l.b16 %v1122
        %v1156 = vunpack.c.l.b16 %v1123
        %v1157 = vunpack.c.l.b16 %v1124
        %v1158 = vunpack.c.l.b16 %v1125
        %v1159 = vpack.c.b16 %v1144, %v1143
        %v1160 = vpack.c.b16 %v1146, %v1145
        %v1161 = vpack.c.b16 %v1148, %v1147
        %v1162 = vpack.c.b16 %v1150, %v1149
        %v1163 = vpack.c.b16 %v1152, %v1151
        %v1164 = vpack.c.b16 %v1154, %v1153
        %v1165 = vpack.c.b16 %v1156, %v1155
        %v1166 = vpack.c.b16 %v1158, %v1157
        %1175 = vmatpush.bf16.msra.mxu0 %v1166
        %1176 = vmatpush.bf16.msra.mxu0 %v1165
        %1177 = vmatpush.bf16.msra.mxu0 %v1164
        %1178 = vmatpush.bf16.msra.mxu0 %v1163
        %1179 = vmatpush.bf16.msra.mxu0 %v1162
        %1180 = vmatpush.bf16.msra.mxu0 %v1161
        %1181 = vmatpush.bf16.msra.mxu0 %v1160
        %1182 = vmatpush.bf16.msra.mxu0 %v1159
        %1183 = vmatmul.bf16.gmra.mxu0 %v1109
        %v1184 = vpop.f32.mrf.mxu0
        %v1185 = vadd.f32 %v1126, %v1184
        %v1186 = vpop.f32.mrf.mxu0
        %1187 = vdwg.mxu0
        %v1188 = vld [vmem:[%s409 + $0xc4] sm:$0xff]
        %v1189 = vld [vmem:[%s409 + $0xd0] sm:$0xff]
        %v1190 = vld [vmem:[%s409 + $0xdc] sm:$0xff]
        %v1191 = vld [vmem:[%s409 + $0xe8] sm:$0xff]
        %v1192 = vld [vmem:[%s409 + $0xf4] sm:$0xff]
        %v1193 = vld [vmem:[%s409 + $0x100] sm:$0xff]
        %v1194 = vld [vmem:[%s409 + $0x10c] sm:$0xff]
        %v1195 = vld [vmem:[%s409 + $0x118] sm:$0xff]
        %v1196 = vld [vmem:[%s409 + $0x124] sm:$0xff]
        %v1197 = vld [vmem:[%s409 + $0x130] sm:$0xff]
        %v1198 = vld [vmem:[%s409 + $0x13c] sm:$0xff]
        %v1199 = vld [vmem:[%s409 + $0x148] sm:$0xff]
        %v1200 = vld [vmem:[%s409 + $0x154] sm:$0xff]
        %v1201 = vld [vmem:[%s409 + $0x160] sm:$0xff]
        %v1202 = vld [vmem:[%s409 + $0x16c] sm:$0xff]
        %v1203 = vld [vmem:[%s409 + $0x178] sm:$0xff]
        %v1204 = vperm.slane %v516, 2
        %v1205 = vperm.slane %v517, 2
        %v1222 = vunpack.c.l.b16 %v1188
        %v1223 = vunpack.c.h.b16 %v1188
        %v1224 = vunpack.c.l.b16 %v1189
        %v1225 = vunpack.c.h.b16 %v1189
        %v1226 = vunpack.c.l.b16 %v1190
        %v1227 = vunpack.c.h.b16 %v1190
        %v1228 = vunpack.c.l.b16 %v1191
        %v1229 = vunpack.c.h.b16 %v1191
        %v1230 = vunpack.c.l.b16 %v1192
        %v1231 = vunpack.c.h.b16 %v1192
        %v1232 = vunpack.c.l.b16 %v1193
        %v1233 = vunpack.c.h.b16 %v1193
        %v1234 = vunpack.c.l.b16 %v1194
        %v1235 = vunpack.c.h.b16 %v1194
        %v1236 = vunpack.c.l.b16 %v1195
        %v1237 = vunpack.c.h.b16 %v1195
        %v1238 = vunpack.c.l.b16 %v1196
        %v1239 = vunpack.c.h.b16 %v1196
        %v1240 = vunpack.c.l.b16 %v1197
        %v1241 = vunpack.c.h.b16 %v1197
        %v1242 = vunpack.c.l.b16 %v1198
        %v1243 = vunpack.c.h.b16 %v1198
        %v1244 = vunpack.c.l.b16 %v1199
        %v1245 = vunpack.c.h.b16 %v1199
        %v1246 = vunpack.c.l.b16 %v1200
        %v1247 = vunpack.c.h.b16 %v1200
        %v1248 = vunpack.c.l.b16 %v1201
        %v1249 = vunpack.c.h.b16 %v1201
        %v1250 = vunpack.c.l.b16 %v1202
        %v1251 = vunpack.c.h.b16 %v1202
        %v1252 = vunpack.c.l.b16 %v1203
        %v1253 = vunpack.c.h.b16 %v1203
        %v1254 = vpack.c.b16 %v1224, %v1222
        %v1255 = vpack.c.b16 %v1225, %v1223
        %v1256 = vpack.c.b16 %v1228, %v1226
        %v1257 = vpack.c.b16 %v1229, %v1227
        %v1258 = vpack.c.b16 %v1232, %v1230
        %v1259 = vpack.c.b16 %v1233, %v1231
        %v1260 = vpack.c.b16 %v1236, %v1234
        %v1261 = vpack.c.b16 %v1237, %v1235
        %v1262 = vpack.c.b16 %v1240, %v1238
        %v1263 = vpack.c.b16 %v1241, %v1239
        %v1264 = vpack.c.b16 %v1244, %v1242
        %v1265 = vpack.c.b16 %v1245, %v1243
        %v1266 = vpack.c.b16 %v1248, %v1246
        %v1267 = vpack.c.b16 %v1249, %v1247
        %v1268 = vpack.c.b16 %v1252, %v1250
        %v1269 = vpack.c.b16 %v1253, %v1251
        %1286 = vmatpush.bf16.msra.mxu0 %v1268
        %1287 = vmatpush.bf16.msra.mxu0 %v1266
        %1288 = vmatpush.bf16.msra.mxu0 %v1264
        %1289 = vmatpush.bf16.msra.mxu0 %v1262
        %1290 = vmatpush.bf16.msra.mxu0 %v1260
        %1291 = vmatpush.bf16.msra.mxu0 %v1258
        %1292 = vmatpush.bf16.msra.mxu0 %v1256
        %1293 = vmatpush.bf16.msra.mxu0 %v1254
        %1294 = vmatmul.bf16.gmra.mxu0 %v519
        %v1295 = vpop.f32.mrf.mxu0
        %v1296 = vadd.f32 %v1204, %v1295
        %v1297 = vpop.f32.mrf.mxu0
        %1298 = vdwg.mxu0
        %1299 = vmatpush.bf16.msra.mxu0 %v1269
        %1300 = vmatpush.bf16.msra.mxu0 %v1267
        %1301 = vmatpush.bf16.msra.mxu0 %v1265
        %1302 = vmatpush.bf16.msra.mxu0 %v1263
        %1303 = vmatpush.bf16.msra.mxu0 %v1261
        %1304 = vmatpush.bf16.msra.mxu0 %v1259
        %1305 = vmatpush.bf16.msra.mxu0 %v1257
        %1306 = vmatpush.bf16.msra.mxu0 %v1255
        %1307 = vmatmul.bf16.gmra.mxu0 %v519
        %v1308 = vpop.f32.mrf.mxu0
        %v1309 = vadd.f32 %v1205, %v1308
        %v1310 = vpop.f32.mrf.mxu0
        %1311 = vdwg.mxu0
        %v1312 = vpack.c.bf16 %v1185, %v1185
        %v1313 = vpack.c.bf16 %v1296, %v1296
        %v1314 = vpack.c.bf16 %v1309, %v1309
        %v1316 = vsel %vm755, %v1312, 0
        %v1319 = vsel %vm755, %v1313, 0
        %1321 = vmatpush.bf16.xpose.msra.mxu0 0
        %1322 = vmatpush.bf16.xpose.msra.mxu0 0
        %1323 = vmatpush.bf16.xpose.msra.mxu0 0
        %1324 = vmatpush.bf16.xpose.msra.mxu0 0
        %1325 = vmatpush.bf16.xpose.msra.mxu0 0
        %1326 = vmatpush.bf16.xpose.msra.mxu0 0
        %1327 = vmatpush.bf16.xpose.msra.mxu0 0
        %1328 = vmatpush.bf16.xpose.msra.mxu0 %v1319
        %1329 = vmatmul.bf16.gmra.mxu0 %v1316
        %v1330 = vpop.f32.mrf.mxu0
        %v1331 = vadd.f32 %v521, %v1330
        %v1332 = vpop.f32.mrf.mxu0
        %1333 = vdwg.mxu0
        %v1334 = vsel %vm775, %v1331, -inf
        %1335 = vmax.xlane.f32.xlu0 %v1334
        %v1336 = vpop.xlane.xlu0 %1335
        %v1337 = vsub.f32 %v1331, %v1336
        %v1338 = vmul.f32 %v1337, 1.442695
        %v1339 = vpow.pop %v1338
        %v1340 = vsel %vm775, %v1339, 0.0
        %1341 = vadd.xlane.f32.xlu0 %v1340
        %v1342 = vpop.xlane.xlu0 %1341
        %v1343 = vrcp.pop %v1342
        %v1344 = vmul.f32 %v1339, %v1343
        %v1345 = vpack.c.bf16 %v1344, %v1344
        %v1347 = vsel %vm775, %v1345, 0
        %v1350 = vsel %vm791, %v1314, 0
        %1352 = vmatpush.bf16.msra.mxu0 0
        %1353 = vmatpush.bf16.msra.mxu0 0
        %1354 = vmatpush.bf16.msra.mxu0 0
        %1355 = vmatpush.bf16.msra.mxu0 0
        %1356 = vmatpush.bf16.msra.mxu0 0
        %1357 = vmatpush.bf16.msra.mxu0 0
        %1358 = vmatpush.bf16.msra.mxu0 0
        %1359 = vmatpush.bf16.msra.mxu0 %v1350
        %1360 = vmatmul.bf16.gmra.mxu0 %v1347
        %v1361 = vpop.f32.mrf.mxu0
        %v1362 = vadd.f32 0.0, %v1361
        %v1363 = vpop.f32.mrf.mxu0
        %1364 = vdwg.mxu0
        %v1366 = vunpack.c.l.b16 %v1312
        %v1367 = vpack.c.b16 %v1366, %v1366
        %1368 = vrot.lane.b32.xlu0 %v1367, 96
        %v1369 = vpop.permute.xlu0 %1368
        %v1371 = vunpack.c.l.b16 %v1313
        %v1372 = vpack.c.b16 %v1371, %v1371
        %1373 = vrot.lane.b32.xlu0 %v1372, 96
        %v1374 = vpop.permute.xlu0 %1373
        %v1376 = vsel %vm755, %v1369, 0
        %v1379 = vsel %vm755, %v1374, 0
        %1381 = vmatpush.bf16.xpose.msra.mxu0 0
        %1382 = vmatpush.bf16.xpose.msra.mxu0 0
        %1383 = vmatpush.bf16.xpose.msra.mxu0 0
        %1384 = vmatpush.bf16.xpose.msra.mxu0 0
        %1385 = vmatpush.bf16.xpose.msra.mxu0 0
        %1386 = vmatpush.bf16.xpose.msra.mxu0 0
        %1387 = vmatpush.bf16.xpose.msra.mxu0 0
        %1388 = vmatpush.bf16.xpose.msra.mxu0 %v1379
        %1389 = vmatmul.bf16.gmra.mxu0 %v1376
        %v1390 = vpop.f32.mrf.mxu0
        %v1391 = vadd.f32 %v521, %v1390
        %v1392 = vpop.f32.mrf.mxu0
        %1393 = vdwg.mxu0
        %v1394 = vsel %vm775, %v1391, -inf
        %1395 = vmax.xlane.f32.xlu0 %v1394
        %v1396 = vpop.xlane.xlu0 %1395
        %v1397 = vsub.f32 %v1391, %v1396
        %v1398 = vmul.f32 %v1397, 1.442695
        %v1399 = vpow.pop %v1398
        %v1400 = vsel %vm775, %v1399, 0.0
        %1401 = vadd.xlane.f32.xlu0 %v1400
        %v1402 = vpop.xlane.xlu0 %1401
        %v1403 = vrcp.pop %v1402
        %v1404 = vmul.f32 %v1399, %v1403
        %v1405 = vpack.c.bf16 %v1404, %v1404
        %v1407 = vunpack.c.l.b16 %v1314
        %v1408 = vpack.c.b16 %v1407, %v1407
        %1409 = vrot.lane.b32.xlu0 %v1408, 96
        %v1410 = vpop.permute.xlu0 %1409
        %v1412 = vsel %vm775, %v1405, 0
        %v1415 = vsel %vm791, %v1410, 0
        %1417 = vmatpush.bf16.msra.mxu0 0
        %1418 = vmatpush.bf16.msra.mxu0 0
        %1419 = vmatpush.bf16.msra.mxu0 0
        %1420 = vmatpush.bf16.msra.mxu0 0
        %1421 = vmatpush.bf16.msra.mxu0 0
        %1422 = vmatpush.bf16.msra.mxu0 0
        %1423 = vmatpush.bf16.msra.mxu0 0
        %1424 = vmatpush.bf16.msra.mxu0 %v1415
        %1425 = vmatmul.bf16.gmra.mxu0 %v1412
        %v1426 = vpop.f32.mrf.mxu0
        %v1427 = vadd.f32 0.0, %v1426
        %v1428 = vpop.f32.mrf.mxu0
        %1429 = vdwg.mxu0
        %1430 = vrot.lane.b32.xlu0 %v1367, 64
        %v1431 = vpop.permute.xlu0 %1430
        %1432 = vrot.lane.b32.xlu0 %v1372, 64
        %v1433 = vpop.permute.xlu0 %1432
        %v1435 = vsel %vm755, %v1431, 0
        %v1438 = vsel %vm755, %v1433, 0
        %1440 = vmatpush.bf16.xpose.msra.mxu0 0
        %1441 = vmatpush.bf16.xpose.msra.mxu0 0
        %1442 = vmatpush.bf16.xpose.msra.mxu0 0
        %1443 = vmatpush.bf16.xpose.msra.mxu0 0
        %1444 = vmatpush.bf16.xpose.msra.mxu0 0
        %1445 = vmatpush.bf16.xpose.msra.mxu0 0
        %1446 = vmatpush.bf16.xpose.msra.mxu0 0
        %1447 = vmatpush.bf16.xpose.msra.mxu0 %v1438
        %1448 = vmatmul.bf16.gmra.mxu0 %v1435
        %v1449 = vpop.f32.mrf.mxu0
        %v1450 = vadd.f32 %v521, %v1449
        %v1451 = vpop.f32.mrf.mxu0
        %1452 = vdwg.mxu0
        %v1453 = vsel %vm775, %v1450, -inf
        %1454 = vmax.xlane.f32.xlu0 %v1453
        %v1455 = vpop.xlane.xlu0 %1454
        %v1456 = vsub.f32 %v1450, %v1455
        %v1457 = vmul.f32 %v1456, 1.442695
        %v1458 = vpow.pop %v1457
        %v1459 = vsel %vm775, %v1458, 0.0
        %1460 = vadd.xlane.f32.xlu0 %v1459
        %v1461 = vpop.xlane.xlu0 %1460
        %v1462 = vrcp.pop %v1461
        %v1463 = vmul.f32 %v1458, %v1462
        %v1464 = vpack.c.bf16 %v1463, %v1463
        %1465 = vrot.lane.b32.xlu0 %v1408, 64
        %v1466 = vpop.permute.xlu0 %1465
        %v1468 = vsel %vm775, %v1464, 0
        %v1471 = vsel %vm791, %v1466, 0
        %1473 = vmatpush.bf16.msra.mxu0 0
        %1474 = vmatpush.bf16.msra.mxu0 0
        %1475 = vmatpush.bf16.msra.mxu0 0
        %1476 = vmatpush.bf16.msra.mxu0 0
        %1477 = vmatpush.bf16.msra.mxu0 0
        %1478 = vmatpush.bf16.msra.mxu0 0
        %1479 = vmatpush.bf16.msra.mxu0 0
        %1480 = vmatpush.bf16.msra.mxu0 %v1471
        %1481 = vmatmul.bf16.gmra.mxu0 %v1468
        %v1482 = vpop.f32.mrf.mxu0
        %v1483 = vadd.f32 0.0, %v1482
        %v1484 = vpop.f32.mrf.mxu0
        %1485 = vdwg.mxu0
        %1486 = vrot.lane.b32.xlu0 %v1367, 32
        %v1487 = vpop.permute.xlu0 %1486
        %1488 = vrot.lane.b32.xlu0 %v1372, 32
        %v1489 = vpop.permute.xlu0 %1488
        %v1491 = vsel %vm755, %v1487, 0
        %v1494 = vsel %vm755, %v1489, 0
        %1496 = vmatpush.bf16.xpose.msra.mxu0 0
        %1497 = vmatpush.bf16.xpose.msra.mxu0 0
        %1498 = vmatpush.bf16.xpose.msra.mxu0 0
        %1499 = vmatpush.bf16.xpose.msra.mxu0 0
        %1500 = vmatpush.bf16.xpose.msra.mxu0 0
        %1501 = vmatpush.bf16.xpose.msra.mxu0 0
        %1502 = vmatpush.bf16.xpose.msra.mxu0 0
        %1503 = vmatpush.bf16.xpose.msra.mxu0 %v1494
        %1504 = vmatmul.bf16.gmra.mxu0 %v1491
        %v1505 = vpop.f32.mrf.mxu0
        %v1506 = vadd.f32 %v521, %v1505
        %v1507 = vpop.f32.mrf.mxu0
        %1508 = vdwg.mxu0
        %v1509 = vsel %vm775, %v1506, -inf
        %1510 = vmax.xlane.f32.xlu0 %v1509
        %v1511 = vpop.xlane.xlu0 %1510
        %v1512 = vsub.f32 %v1506, %v1511
        %v1513 = vmul.f32 %v1512, 1.442695
        %v1514 = vpow.pop %v1513
        %v1515 = vsel %vm775, %v1514, 0.0
        %1516 = vadd.xlane.f32.xlu0 %v1515
        %v1517 = vpop.xlane.xlu0 %1516
        %v1518 = vrcp.pop %v1517
        %v1519 = vmul.f32 %v1514, %v1518
        %v1520 = vpack.c.bf16 %v1519, %v1519
        %1521 = vrot.lane.b32.xlu0 %v1408, 32
        %v1522 = vpop.permute.xlu0 %1521
        %v1524 = vsel %vm775, %v1520, 0
        %v1527 = vsel %vm791, %v1522, 0
        %1529 = vmatpush.bf16.msra.mxu0 0
        %1530 = vmatpush.bf16.msra.mxu0 0
        %1531 = vmatpush.bf16.msra.mxu0 0
        %1532 = vmatpush.bf16.msra.mxu0 0
        %1533 = vmatpush.bf16.msra.mxu0 0
        %1534 = vmatpush.bf16.msra.mxu0 0
        %1535 = vmatpush.bf16.msra.mxu0 0
        %1536 = vmatpush.bf16.msra.mxu0 %v1527
        %1537 = vmatmul.bf16.gmra.mxu0 %v1524
        %v1538 = vpop.f32.mrf.mxu0
        %v1539 = vadd.f32 0.0, %v1538
        %v1540 = vpop.f32.mrf.mxu0
        %1541 = vdwg.mxu0
        %1543 = vrot.lane.b32.xlu0 %v1427, 32
        %v1544 = vpop.permute.xlu0 %1543
        %1547 = vrot.lane.b32.xlu0 %v1483, 64
        %v1548 = vpop.permute.xlu0 %1547
        %1551 = vrot.lane.b32.xlu0 %v1539, 96
        %v1552 = vpop.permute.xlu0 %1551
        %v1554 = vsel %vm755, %v1362, %v1544
        %v1555 = vsel %vm998, %v1554, %v1548
        %v1556 = vsel %vm1000, %v1555, %v1552
        %v1557 = vpack.c.bf16 %v1556, %v1556
        %v1558 = vld [vmem:[%s419 + $0x40] sm:$0xf]
        %v1559 = vld [vmem:[%s419 + $0x44] sm:$0xf]
        %v1560 = vld [vmem:[%s419 + $0x48] sm:$0xf]
        %v1561 = vld [vmem:[%s419 + $0x4c] sm:$0xf]
        %v1562 = vld [vmem:[%s419 + $0x50] sm:$0xf]
        %v1563 = vld [vmem:[%s419 + $0x54] sm:$0xf]
        %v1564 = vld [vmem:[%s419 + $0x58] sm:$0xf]
        %v1565 = vld [vmem:[%s419 + $0x5c] sm:$0xf]
        %v1566 = vld [vmem:[%s419 + $0x60] sm:$0xf]
        %v1567 = vld [vmem:[%s419 + $0x64] sm:$0xf]
        %v1568 = vld [vmem:[%s419 + $0x68] sm:$0xf]
        %v1569 = vld [vmem:[%s419 + $0x6c] sm:$0xf]
        %v1570 = vld [vmem:[%s419 + $0x70] sm:$0xf]
        %v1571 = vld [vmem:[%s419 + $0x74] sm:$0xf]
        %v1572 = vld [vmem:[%s419 + $0x78] sm:$0xf]
        %v1573 = vld [vmem:[%s419 + $0x7c] sm:$0xf]
        %v1574 = vperm.slane %v515, 3
        %v1591 = vunpack.c.l.b16 %v1558
        %v1592 = vunpack.c.l.b16 %v1559
        %v1593 = vunpack.c.l.b16 %v1560
        %v1594 = vunpack.c.l.b16 %v1561
        %v1595 = vunpack.c.l.b16 %v1562
        %v1596 = vunpack.c.l.b16 %v1563
        %v1597 = vunpack.c.l.b16 %v1564
        %v1598 = vunpack.c.l.b16 %v1565
        %v1599 = vunpack.c.l.b16 %v1566
        %v1600 = vunpack.c.l.b16 %v1567
        %v1601 = vunpack.c.l.b16 %v1568
        %v1602 = vunpack.c.l.b16 %v1569
        %v1603 = vunpack.c.l.b16 %v1570
        %v1604 = vunpack.c.l.b16 %v1571
        %v1605 = vunpack.c.l.b16 %v1572
        %v1606 = vunpack.c.l.b16 %v1573
        %v1607 = vpack.c.b16 %v1592, %v1591
        %v1608 = vpack.c.b16 %v1594, %v1593
        %v1609 = vpack.c.b16 %v1596, %v1595
        %v1610 = vpack.c.b16 %v1598, %v1597
        %v1611 = vpack.c.b16 %v1600, %v1599
        %v1612 = vpack.c.b16 %v1602, %v1601
        %v1613 = vpack.c.b16 %v1604, %v1603
        %v1614 = vpack.c.b16 %v1606, %v1605
        %1623 = vmatpush.bf16.msra.mxu0 %v1614
        %1624 = vmatpush.bf16.msra.mxu0 %v1613
        %1625 = vmatpush.bf16.msra.mxu0 %v1612
        %1626 = vmatpush.bf16.msra.mxu0 %v1611
        %1627 = vmatpush.bf16.msra.mxu0 %v1610
        %1628 = vmatpush.bf16.msra.mxu0 %v1609
        %1629 = vmatpush.bf16.msra.mxu0 %v1608
        %1630 = vmatpush.bf16.msra.mxu0 %v1607
        %1631 = vmatmul.bf16.gmra.mxu0 %v1557
        %v1632 = vpop.f32.mrf.mxu0
        %v1633 = vadd.f32 %v1574, %v1632
        %v1634 = vpop.f32.mrf.mxu0
        %1635 = vdwg.mxu0
        %v1636 = vadd.f32 %v1081, %v1633
        %1637 = vadd.xlane.f32.xlu0 %v1636
        %v1638 = vpop.xlane.xlu0 %1637
        %v1639 = vmul.f32 %v1638, 0.03125
        %v1640 = vmul.f32 %v1636, %v1636
        %1641 = vadd.xlane.f32.xlu0 %v1640
        %v1642 = vpop.xlane.xlu0 %1641
        %v1643 = vmul.f32 %v1642, 0.03125
        %v1644 = vmul.f32 %v1639, %v1639
        %v1645 = vsub.f32 %v1643, %v1644
        %v1646 = vmax.f32 %v1645, 0.0
        %v1647 = vsub.f32 %v1636, %v1639
        %v1648 = vadd.f32 %v1646, 1e-05
        %v1649 = vrsqrt.pop %v1648
        %v1650 = vmul.f32 %v1649, %v1648
        %v1651 = vmul.f32 %v1650, %v1649
        %v1652 = vmul.f32 0.5, %v1651
        %v1653 = vsub.f32 1.5, %v1652
        %v1654 = vmul.f32 %v1649, %v1653
        %vm1655 = vweird.f32 %v1648
        %vm1656 = vweird.f32 %v1649
        %vm1657 = vmor %vm1655, %vm1656
        %v1658 = vsel %vm1657, %v1649, %v1654
        %v1659 = vmul.f32 %v1647, %v1658
        %v1660 = vperm.slane %v518, 2
        %v1661 = vmul.f32 %v1659, %v1660
        %v1662 = vperm.slane %v518, 3
        %v1663 = vadd.f32 %v1661, %v1662
        %v1664 = vpack.c.bf16 %v1663, %v1663
        %v1665 = vld [vmem:[%s501] sm:$0xf]
        %v1666 = vld [vmem:[%s501 + $0x4] sm:$0xf]
        %v1667 = vld [vmem:[%s501 + $0x8] sm:$0xf]
        %v1668 = vld [vmem:[%s501 + $0xc] sm:$0xf]
        %v1669 = vld [vmem:[%s501 + $0x10] sm:$0xf]
        %v1670 = vld [vmem:[%s501 + $0x14] sm:$0xf]
        %v1671 = vld [vmem:[%s501 + $0x18] sm:$0xf]
        %v1672 = vld [vmem:[%s501 + $0x1c] sm:$0xf]
        %v1673 = vld [vmem:[%s501 + $0x20] sm:$0xf]
        %v1674 = vld [vmem:[%s501 + $0x24] sm:$0xf]
        %v1675 = vld [vmem:[%s501 + $0x28] sm:$0xf]
        %v1676 = vld [vmem:[%s501 + $0x2c] sm:$0xf]
        %v1677 = vld [vmem:[%s501 + $0x30] sm:$0xf]
        %v1678 = vld [vmem:[%s501 + $0x34] sm:$0xf]
        %v1679 = vld [vmem:[%s501 + $0x38] sm:$0xf]
        %v1680 = vld [vmem:[%s501 + $0x3c] sm:$0xf]
        %v1681 = vperm.slane %v515, 4
        %v1698 = vunpack.c.l.b16 %v1665
        %v1699 = vunpack.c.l.b16 %v1666
        %v1700 = vunpack.c.l.b16 %v1667
        %v1701 = vunpack.c.l.b16 %v1668
        %v1702 = vunpack.c.l.b16 %v1669
        %v1703 = vunpack.c.l.b16 %v1670
        %v1704 = vunpack.c.l.b16 %v1671
        %v1705 = vunpack.c.l.b16 %v1672
        %v1706 = vunpack.c.l.b16 %v1673
        %v1707 = vunpack.c.l.b16 %v1674
        %v1708 = vunpack.c.l.b16 %v1675
        %v1709 = vunpack.c.l.b16 %v1676
        %v1710 = vunpack.c.l.b16 %v1677
        %v1711 = vunpack.c.l.b16 %v1678
        %v1712 = vunpack.c.l.b16 %v1679
        %v1713 = vunpack.c.l.b16 %v1680
        %v1714 = vpack.c.b16 %v1699, %v1698
        %v1715 = vpack.c.b16 %v1701, %v1700
        %v1716 = vpack.c.b16 %v1703, %v1702
        %v1717 = vpack.c.b16 %v1705, %v1704
        %v1718 = vpack.c.b16 %v1707, %v1706
        %v1719 = vpack.c.b16 %v1709, %v1708
        %v1720 = vpack.c.b16 %v1711, %v1710
        %v1721 = vpack.c.b16 %v1713, %v1712
        %1730 = vmatpush.bf16.msra.mxu0 %v1721
        %1731 = vmatpush.bf16.msra.mxu0 %v1720
        %1732 = vmatpush.bf16.msra.mxu0 %v1719
        %1733 = vmatpush.bf16.msra.mxu0 %v1718
        %1734 = vmatpush.bf16.msra.mxu0 %v1717
        %1735 = vmatpush.bf16.msra.mxu0 %v1716
        %1736 = vmatpush.bf16.msra.mxu0 %v1715
        %1737 = vmatpush.bf16.msra.mxu0 %v1714
        %1738 = vmatmul.bf16.gmra.mxu0 %v1664
        %v1739 = vpop.f32.mrf.mxu0
        %v1740 = vadd.f32 %v1681, %v1739
        %v1741 = vpop.f32.mrf.mxu0
        %1742 = vdwg.mxu0
        %v1743 = vmax.f32 %v1740, 0.0
        %v1744 = vpack.c.bf16 %v1743, %v1743
        %v1745 = vld [vmem:[%s419 + $0x80] sm:$0xf]
        %v1746 = vld [vmem:[%s419 + $0x84] sm:$0xf]
        %v1747 = vld [vmem:[%s419 + $0x88] sm:$0xf]
        %v1748 = vld [vmem:[%s419 + $0x8c] sm:$0xf]
        %v1749 = vld [vmem:[%s419 + $0x90] sm:$0xf]
        %v1750 = vld [vmem:[%s419 + $0x94] sm:$0xf]
        %v1751 = vld [vmem:[%s419 + $0x98] sm:$0xf]
        %v1752 = vld [vmem:[%s419 + $0x9c] sm:$0xf]
        %v1753 = vld [vmem:[%s419 + $0xa0] sm:$0xf]
        %v1754 = vld [vmem:[%s419 + $0xa4] sm:$0xf]
        %v1755 = vld [vmem:[%s419 + $0xa8] sm:$0xf]
        %v1756 = vld [vmem:[%s419 + $0xac] sm:$0xf]
        %v1757 = vld [vmem:[%s419 + $0xb0] sm:$0xf]
        %v1758 = vld [vmem:[%s419 + $0xb4] sm:$0xf]
        %v1759 = vld [vmem:[%s419 + $0xb8] sm:$0xf]
        %v1760 = vld [vmem:[%s419 + $0xbc] sm:$0xf]
        %v1761 = vperm.slane %v515, 5
        %v1778 = vunpack.c.l.b16 %v1745
        %v1779 = vunpack.c.l.b16 %v1746
        %v1780 = vunpack.c.l.b16 %v1747
        %v1781 = vunpack.c.l.b16 %v1748
        %v1782 = vunpack.c.l.b16 %v1749
        %v1783 = vunpack.c.l.b16 %v1750
        %v1784 = vunpack.c.l.b16 %v1751
        %v1785 = vunpack.c.l.b16 %v1752
        %v1786 = vunpack.c.l.b16 %v1753
        %v1787 = vunpack.c.l.b16 %v1754
        %v1788 = vunpack.c.l.b16 %v1755
        %v1789 = vunpack.c.l.b16 %v1756
        %v1790 = vunpack.c.l.b16 %v1757
        %v1791 = vunpack.c.l.b16 %v1758
        %v1792 = vunpack.c.l.b16 %v1759
        %v1793 = vunpack.c.l.b16 %v1760
        %v1794 = vpack.c.b16 %v1779, %v1778
        %v1795 = vpack.c.b16 %v1781, %v1780
        %v1796 = vpack.c.b16 %v1783, %v1782
        %v1797 = vpack.c.b16 %v1785, %v1784
        %v1798 = vpack.c.b16 %v1787, %v1786
        %v1799 = vpack.c.b16 %v1789, %v1788
        %v1800 = vpack.c.b16 %v1791, %v1790
        %v1801 = vpack.c.b16 %v1793, %v1792
        %1810 = vmatpush.bf16.msra.mxu0 %v1801
        %1811 = vmatpush.bf16.msra.mxu0 %v1800
        %1812 = vmatpush.bf16.msra.mxu0 %v1799
        %1813 = vmatpush.bf16.msra.mxu0 %v1798
        %1814 = vmatpush.bf16.msra.mxu0 %v1797
        %1815 = vmatpush.bf16.msra.mxu0 %v1796
        %1816 = vmatpush.bf16.msra.mxu0 %v1795
        %1817 = vmatpush.bf16.msra.mxu0 %v1794
        %1818 = vmatmul.bf16.gmra.mxu0 %v1744
        %v1819 = vpop.f32.mrf.mxu0
        %v1820 = vadd.f32 %v1761, %v1819
        %v1821 = vpop.f32.mrf.mxu0
        %1822 = vdwg.mxu0
        %v1823 = vadd.f32 %v1633, %v1820
        %1824 = vst [vmem:[#allocation2] sm:$0xff] %v1823
        %p1825 = scmp.eq.s32.totalorder %s33, 1
        // Predicated region
        $region69: #{tpu_custom_call.1} parent=51 // pred_check
          %p1826 = pneg %p1825
        $region70: #{tpu_custom_call.1} parent=51 // pred_check_branch
          %1828 = sbr.rel (%p1826) target = $region72
        $region71: #{tpu_custom_call.1} parent=51 // pred_region
          %1829 = vst [vmem:[%s484] sm:$0xff] %v1823
        $region72: #{tpu_custom_call.1} parent=51 // pred_fallthru
          _
        %s1830 = sand.u32 %s256, 1
        %s1831 = scalar_lea.sflag [#allocation5], %s1830
        %s1832 = sand.u32 %s256, 1
        %s1833 = smul.addr %s1832, 8
        %s1834 = scalar_lea.vmem [#allocation9], %s1833
        // Predicated region
        $region73: #{tpu_custom_call.1} parent=51 // pred_check
          %p1835 = pneg %p266
        $region74: #{tpu_custom_call.1} parent=51 // pred_check_branch
          %1837 = sbr.rel (%p1835) target = $region76
        $region75: #{tpu_custom_call.1} parent=51 // pred_region
          %1839 = vsyncadd %s1831, 0
          %s1840 = smul.addr %s32, 8
          %s1841 = scalar_lea.hbm %s8, %s1840
          %s1843 = sshll.u32 %s1834, 4
          %s1844 = int_to_ptr.vmem [resolvable:$true] %s1843
          %s1845 = sshll.u32 %s1841, 4
          %s1846 = int_to_ptr.hbm [resolvable:$true] %s1845
          %1848 = dma.vmem_to_hbm [thread:$0]  %s1844, 128, %s1846, %s1831
        $region76: #{tpu_custom_call.1} parent=51 // pred_fallthru
          _
      $region52: #{tpu_custom_call.1} parent=5 // pred_fallthru
        _
      %p1849 = scmp.le.s32.totalorder 2, %s23
      // Predicated region
      $region77: #{tpu_custom_call.1} parent=5 // pred_check
        %p1850 = pneg %p1849
      $region78: #{tpu_custom_call.1} parent=5 // pred_check_branch
        %1852 = sbr.rel (%p1850) target = $region80
      $region79: #{tpu_custom_call.1} parent=5 // pred_region
        %s1853 = ssub.s32 %s23, 2
        // Predicated region
        $region81: #{tpu_custom_call.1} parent=79 // pred_check
          %p1854 = pneg %p272
        $region82: #{tpu_custom_call.1} parent=79 // pred_check_branch
          %1856 = sbr.rel (%p1854) target = $region84
        $region83: #{tpu_custom_call.1} parent=79 // pred_region
          %s1857 = sand.u32 %s257, 1
          %s1858 = scalar_lea.sflag [#allocation5], %s1857
          %s1859 = sand.u32 %s257, 1
          %s1860 = smul.addr %s1859, 8
          %s1861 = scalar_lea.vmem [#allocation9], %s1860
          %1863 = dma.done %s1858, 128
        $region84: #{tpu_custom_call.1} parent=79 // pred_fallthru
          _
      $region80: #{tpu_custom_call.1} parent=5 // pred_fallthru
        _
    $region6: #{tpu_custom_call.1} parent=1 // loop_footer
      %s27 = sadd.s32 1, %s23
    $region7: #{tpu_custom_call.1} parent=1 // loop_footer_branch
      %22 = sbr.rel target = $region3
    $region8: #{tpu_custom_call.1} parent=1 // loop_exit
      _
    %1864 = vsyncpa [#allocation4], 1
    %s1865 = scalar_lea.sflag [#allocation4], 1
    %1866 = vsyncpa %s1865, 1
    %1867 = vsyncpa [#allocation7], 1
    %s1868 = scalar_lea.sflag [#allocation7], 1
    %1869 = vsyncpa %s1868, 1
    %1870 = vsyncpa [#allocation5], 1
    %s1871 = scalar_lea.sflag [#allocation5], 1
    %1872 = vsyncpa %s1871, 1

</llo_original>
